<compile_context>
chip_gen: v7x
topology: tpu7x:2x2x1
jax: 0.10.0
libtpu: 0.0.40
codegen_flags: <defaults>
</compile_context>

<pallas_src>
import functools

import numpy as np
import jax
import jax.numpy as jnp
from jax.experimental import pallas as pl
from jax.experimental.pallas import tpu as pltpu

SELU_ALPHA = 1.6732632423543772848170429916717
SELU_SCALE = 1.0507009873554804934193349852946
GN_EPS = 1e-5


def _selu(x):
    # clamp the exp argument so the discarded branch never produces inf
    safe = jnp.minimum(x, 0.0)
    return SELU_SCALE * jnp.where(x > 0, x, SELU_ALPHA * (jnp.exp(safe) - 1.0))


# ----------------------------- Pallas kernel ------------------------------ #
def _resblock_down_kernel(x_ref, t_ref,
                          g1_ref, b1_ref,
                          ffw_ref, ffb_ref,
                          g2_ref, b2_ref,
                          convw_ref, convb_ref, mask_ref,
                          o_ref, *, num_groups, wp):
    f32 = jnp.float32
    x = x_ref[0].astype(f32)                    # (K=4 pool taps, C, L=Hp*Wp)
    K, C, L = x.shape
    G = num_groups
    Cg = C // G

    # --- GroupNorm1 (per-sample, per-group, centered biased var) + SELU ---
    # stats over (4 taps, Cg channels, L pooled positions) == (H*W, Cg) elems
    inv_cnt1 = 1.0 / float(K * Cg * L)
    parts = []
    for g in range(G):
        blk = x[:, g * Cg:(g + 1) * Cg, :]
        m = jnp.sum(blk) * inv_cnt1
        d = blk - m
        v = jnp.sum(d * d) * inv_cnt1
        parts.append(d * jax.lax.rsqrt(v + GN_EPS))
    xn = jnp.concatenate(parts, axis=1)         # (K, C, L)
    xa = _selu(xn * g1_ref[...] + b1_ref[...])  # (C,1) gamma/beta broadcast

    # --- AvgPool2d(2,2): mean over the 4 tap slabs (pure VPU, no matmul) ---
    xp = jnp.sum(xa, axis=0) * 0.25             # (C, L)

    # --- time branch: Linear(selu(t)) as VPU multiply + lane reduce ---
    tv = _selu(t_ref[0].astype(f32))            # (1, T)
    tproj = jnp.sum(ffw_ref[...] * tv, axis=1, keepdims=True) + ffb_ref[...]  # (C,1)

    # x_t = avgpool(...) + t_proj (broadcast over spatial)
    xt = xp + tproj                             # (C, L)

    # --- GroupNorm2 + SELU ---
    # TODO(synk): nn.Dropout is identity at inference; train-mode RNG masking not implemented.
    inv_cnt2 = 1.0 / float(Cg * L)
    parts2 = []
    for g in range(G):
        blk = xt[g * Cg:(g + 1) * Cg, :]
        m = jnp.sum(blk) * inv_cnt2
        d = blk - m
        v = jnp.sum(d * d) * inv_cnt2
        parts2.append(d * jax.lax.rsqrt(v + GN_EPS))
    hn = jnp.concatenate(parts2, axis=0)        # (C, L)
    h = _selu(hn * g2_ref[...] + b2_ref[...])

    # --- Conv2d(C, C, 3, padding=1): im2col via lane shifts + one matmul ---
    taps = []
    for k in range(9):
        dy, dx = k // 3 - 1, k % 3 - 1
        s = dy * wp + dx                        # flat lane offset of this tap
        if s > 0:
            sh = jnp.concatenate([h[:, s:], jnp.zeros((C, s), f32)], axis=1)
        elif s < 0:
            sh = jnp.concatenate([jnp.zeros((C, -s), f32), h[:, :L + s]], axis=1)
        else:
            sh = h
        taps.append(sh * mask_ref[k])           # (1, L) validity mask per tap
    him = jnp.concatenate(taps, axis=0)         # (9*C, L) im2col slab
    conv = jnp.dot(convw_ref[...], him, preferred_element_type=f32)   # (C, L)

    # residual: conv_out + bias + x_t
    o_ref[0] = (conv + convb_ref[...] + xt).astype(o_ref.dtype)


# ------------------------- host-side glue / setup -------------------------- #
def _conv_tap_masks(hp, wp):
    """(9, 1, Hp*Wp) 0/1 masks: output position valid for tap (dy,dx)."""
    m = np.zeros((9, 1, hp * wp), np.float32)
    for k in range(9):
        dy, dx = k // 3 - 1, k % 3 - 1
        for py in range(hp):
            for px in range(wp):
                if 0 <= py + dy < hp and 0 <= px + dx < wp:
                    m[k, 0, py * wp + px] = 1.0
    return m


def resblock_down_forward(x_nhwc, t, params, num_groups=4):
    N, H, W, C = x_nhwc.shape
    T = t.shape[1]
    Hp, Wp = H // 2, W // 2
    L = Hp * Wp

    # layout plumbing (not compute hoisting): split the 2x2 pool taps out and
    # go channels-major so the lane axis is the pooled spatial dim.
    x4 = (x_nhwc.reshape(N, Hp, 2, Wp, 2, C)
          .transpose(0, 2, 4, 5, 1, 3)          # (N, dy, dx, C, Hp, Wp)
          .reshape(N, 4, C, L))
    t3 = t.reshape(N, 1, T)

    g1 = params["gn1_w"].reshape(C, 1)
    b1 = params["gn1_b"].reshape(C, 1)
    g2 = params["gn2_w"].reshape(C, 1)
    b2 = params["gn2_b"].reshape(C, 1)
    ffw = params["ff1_w"]                        # torch Linear weight (C, T)
    ffb = params["ff1_b"].reshape(C, 1)
    # torch conv weight (O, I, kh, kw) -> (O, k*I + i) matching im2col row order
    convw = jnp.transpose(params["conv2_w"], (0, 2, 3, 1)).reshape(C, 9 * C)
    convb = params["conv2_b"].reshape(C, 1)
    masks = jnp.asarray(_conv_tap_masks(Hp, Wp))  # (9, 1, L) — O(HWp) constant

    def full(shape):
        return pl.BlockSpec(shape, lambda n, _nd=len(shape): (0,) * _nd)

    kernel = functools.partial(_resblock_down_kernel, num_groups=num_groups, wp=Wp)

    out = pl.pallas_call(
        kernel,
        out_shape=jax.ShapeDtypeStruct((N, C, L), x_nhwc.dtype),
        grid=(N,),
        in_specs=[
            pl.BlockSpec((1, 4, C, L), lambda n: (n, 0, 0, 0)),   # x taps
            pl.BlockSpec((1, 1, T), lambda n: (n, 0, 0)),         # t
            full((C, 1)), full((C, 1)),                           # gn1 gamma/beta
            full((C, T)), full((C, 1)),                           # ff1 weight/bias
            full((C, 1)), full((C, 1)),                           # gn2 gamma/beta
            full((C, 9 * C)), full((C, 1)), full((9, 1, L)),      # conv w/b, tap masks
        ],
        out_specs=pl.BlockSpec((1, C, L), lambda n: (n, 0, 0)),
        compiler_params=pltpu.CompilerParams(dimension_semantics=("parallel",)),
    )(x4, t3, g1, b1, ffw, ffb, g2, b2, convw, convb, masks)

    return out.reshape(N, C, Hp, Wp).transpose(0, 2, 3, 1)


# ---------------------------- pure-JAX reference --------------------------- #
def _reference(x, t, params, num_groups=4):
    N, H, W, C = x.shape

    def gn(v, w, b):
        n, h, wd, c = v.shape
        g = num_groups
        cg = c // g
        vr = v.reshape(n, h * wd, g, cg)
        mean = vr.mean(axis=(1, 3), keepdims=True)
        var = ((vr - mean) ** 2).mean(axis=(1, 3), keepdims=True)
        vn = ((vr - mean) / jnp.sqrt(var + GN_EPS)).reshape(n, h, wd, c)
        return vn * w + b

    x1 = _selu(gn(x, params["gn1_w"], params["gn1_b"]))
    xp = x1.reshape(N, H // 2, 2, W // 2, 2, C).mean(axis=(2, 4))
    tp = _selu(t) @ params["ff1_w"].T + params["ff1_b"]
    xt = xp + tp[:, None, None, :]
    h2 = _selu(gn(xt, params["gn2_w"], params["gn2_b"]))
    conv = jax.lax.conv_general_dilated(
        h2, jnp.transpose(params["conv2_w"], (2, 3, 1, 0)),
        window_strides=(1, 1), padding="SAME",
        dimension_numbers=("NHWC", "HWIO", "NHWC"))
    return conv + params["conv2_b"] + xt


# ---------------------------------- main ----------------------------------- #
if __name__ == "__main__":
    N, H, W, C, T, G = 2, 16, 16, 8, 32, 4   # in_dim = out_dim = 8, in_time = 32

    key = jax.random.PRNGKey(0)
    k = jax.random.split(key, 10)
    x = jax.random.normal(k[0], (N, H, W, C), jnp.float32)
    t = jax.random.normal(k[1], (N, T), jnp.float32)

    params = {
        "gn1_w": 1.0 + 0.1 * jax.random.normal(k[2], (C,), jnp.float32),
        "gn1_b": 0.1 * jax.random.normal(k[3], (C,), jnp.float32),
        "gn2_w": 1.0 + 0.1 * jax.random.normal(k[4], (C,), jnp.float32),
        "gn2_b": 0.1 * jax.random.normal(k[5], (C,), jnp.float32),
        "ff1_w": 0.1 * jax.random.normal(k[6], (C, T), jnp.float32),      # torch Linear (out, in)
        "ff1_b": 0.1 * jax.random.normal(k[7], (C,), jnp.float32),
        "conv2_w": 0.1 * jax.random.normal(k[8], (C, C, 3, 3), jnp.float32),
        "conv2_b": 0.1 * jax.random.normal(k[9], (C,), jnp.float32),
    }

    out = resblock_down_forward(x, t, params, num_groups=G)
    out = jax.block_until_ready(out)

    ref = _reference(x, t, params, num_groups=G)
    np.testing.assert_allclose(np.asarray(out), np.asarray(ref), rtol=2e-3, atol=2e-3)

    print("KERNEL_OK")
</pallas_src>

<mosaic_0001>
module attributes {stable_mosaic.version = 11 : i64} {
  func.func @_resblock_down_kernel(%arg0: i32, %arg1: memref<1x4x8x64xf32, #tpu.memory_space<vmem>>, %arg2: memref<1x1x32xf32, #tpu.memory_space<vmem>>, %arg3: memref<8x1xf32, #tpu.memory_space<vmem>>, %arg4: memref<8x1xf32, #tpu.memory_space<vmem>>, %arg5: memref<8x32xf32, #tpu.memory_space<vmem>>, %arg6: memref<8x1xf32, #tpu.memory_space<vmem>>, %arg7: memref<8x1xf32, #tpu.memory_space<vmem>>, %arg8: memref<8x1xf32, #tpu.memory_space<vmem>>, %arg9: memref<8x72xf32, #tpu.memory_space<vmem>>, %arg10: memref<8x1xf32, #tpu.memory_space<vmem>>, %arg11: memref<9x1x64xf32, #tpu.memory_space<vmem>>, %arg12: memref<1x8x64xf32, #tpu.memory_space<vmem>>) attributes {dimension_semantics = [#tpu.dimension_semantics<parallel>], iteration_bounds = array<i64: 2>, scalar_prefetch = 0 : i64, scratch_operands = 0 : i64, tpu.core_type = #tpu.core_type<tc>, window_params = [{transform_indices = @transform_0, window_bounds = array<i64: 1, 4, 8, 64>}, {transform_indices = @transform_1, window_bounds = array<i64: 1, 1, 32>}, {pipeline_mode = #tpu.pipeline_mode<synchronous>, transform_indices = @transform_2, window_bounds = array<i64: 8, 1>}, {pipeline_mode = #tpu.pipeline_mode<synchronous>, transform_indices = @transform_3, window_bounds = array<i64: 8, 1>}, {pipeline_mode = #tpu.pipeline_mode<synchronous>, transform_indices = @transform_4, window_bounds = array<i64: 8, 32>}, {pipeline_mode = #tpu.pipeline_mode<synchronous>, transform_indices = @transform_5, window_bounds = array<i64: 8, 1>}, {pipeline_mode = #tpu.pipeline_mode<synchronous>, transform_indices = @transform_6, window_bounds = array<i64: 8, 1>}, {pipeline_mode = #tpu.pipeline_mode<synchronous>, transform_indices = @transform_7, window_bounds = array<i64: 8, 1>}, {pipeline_mode = #tpu.pipeline_mode<synchronous>, transform_indices = @transform_8, window_bounds = array<i64: 8, 72>}, {pipeline_mode = #tpu.pipeline_mode<synchronous>, transform_indices = @transform_9, window_bounds = array<i64: 8, 1>}, {pipeline_mode = #tpu.pipeline_mode<synchronous>, transform_indices = @transform_10, window_bounds = array<i64: 9, 1, 64>}, {transform_indices = @transform_11, window_bounds = array<i64: 1, 8, 64>}]} {
    %c0 = arith.constant 0 : index
    %c0_0 = arith.constant 0 : index
    %c0_1 = arith.constant 0 : index
    %c0_2 = arith.constant 0 : index
    %0 = vector.load %arg1[%c0, %c0_0, %c0_1, %c0_2] : memref<1x4x8x64xf32, #tpu.memory_space<vmem>>, vector<1x4x8x64xf32>
    %1 = vector.shape_cast %0 : vector<1x4x8x64xf32> to vector<4x8x64xf32>
    %2 = vector.extract_strided_slice %1 {offsets = [0, 0, 0], sizes = [4, 2, 64], strides = [1, 1, 1]} : vector<4x8x64xf32> to vector<4x2x64xf32>
    %3 = vector.shape_cast %2 : vector<4x2x64xf32> to vector<1x4x2x64xf32>
    %cst = arith.constant dense<0.000000e+00> : vector<1xf32>
    %4 = vector.multi_reduction <add>, %3, %cst [1, 2, 3] : vector<1x4x2x64xf32> to vector<1xf32>
    %5 = vector.shape_cast %4 : vector<1xf32> to vector<1x1x1x1xf32>
    %6 = vector.extract %5[0, 0, 0, 0] : f32 from vector<1x1x1x1xf32>
    %cst_3 = arith.constant 0.001953125 : f32
    %7 = arith.mulf %6, %cst_3 : f32
    %8 = vector.broadcast %7 : f32 to vector<4x2x64xf32>
    %9 = arith.subf %2, %8 : vector<4x2x64xf32>
    %10 = arith.mulf %9, %9 : vector<4x2x64xf32>
    %11 = vector.shape_cast %10 : vector<4x2x64xf32> to vector<1x4x2x64xf32>
    %cst_4 = arith.constant dense<0.000000e+00> : vector<1xf32>
    %12 = vector.multi_reduction <add>, %11, %cst_4 [1, 2, 3] : vector<1x4x2x64xf32> to vector<1xf32>
    %13 = vector.shape_cast %12 : vector<1xf32> to vector<1x1x1x1xf32>
    %14 = vector.extract %13[0, 0, 0, 0] : f32 from vector<1x1x1x1xf32>
    %cst_5 = arith.constant 0.001953125 : f32
    %15 = arith.mulf %14, %cst_5 : f32
    %cst_6 = arith.constant 9.99999974E-6 : f32
    %16 = arith.addf %15, %cst_6 : f32
    %17 = math.rsqrt %16 : f32
    %18 = vector.broadcast %17 : f32 to vector<4x2x64xf32>
    %19 = arith.mulf %9, %18 : vector<4x2x64xf32>
    %20 = vector.extract_strided_slice %1 {offsets = [0, 2, 0], sizes = [4, 2, 64], strides = [1, 1, 1]} : vector<4x8x64xf32> to vector<4x2x64xf32>
    %21 = vector.shape_cast %20 : vector<4x2x64xf32> to vector<1x4x2x64xf32>
    %cst_7 = arith.constant dense<0.000000e+00> : vector<1xf32>
    %22 = vector.multi_reduction <add>, %21, %cst_7 [1, 2, 3] : vector<1x4x2x64xf32> to vector<1xf32>
    %23 = vector.shape_cast %22 : vector<1xf32> to vector<1x1x1x1xf32>
    %24 = vector.extract %23[0, 0, 0, 0] : f32 from vector<1x1x1x1xf32>
    %cst_8 = arith.constant 0.001953125 : f32
    %25 = arith.mulf %24, %cst_8 : f32
    %26 = vector.broadcast %25 : f32 to vector<4x2x64xf32>
    %27 = arith.subf %20, %26 : vector<4x2x64xf32>
    %28 = arith.mulf %27, %27 : vector<4x2x64xf32>
    %29 = vector.shape_cast %28 : vector<4x2x64xf32> to vector<1x4x2x64xf32>
    %cst_9 = arith.constant dense<0.000000e+00> : vector<1xf32>
    %30 = vector.multi_reduction <add>, %29, %cst_9 [1, 2, 3] : vector<1x4x2x64xf32> to vector<1xf32>
    %31 = vector.shape_cast %30 : vector<1xf32> to vector<1x1x1x1xf32>
    %32 = vector.extract %31[0, 0, 0, 0] : f32 from vector<1x1x1x1xf32>
    %cst_10 = arith.constant 0.001953125 : f32
    %33 = arith.mulf %32, %cst_10 : f32
    %cst_11 = arith.constant 9.99999974E-6 : f32
    %34 = arith.addf %33, %cst_11 : f32
    %35 = math.rsqrt %34 : f32
    %36 = vector.broadcast %35 : f32 to vector<4x2x64xf32>
    %37 = arith.mulf %27, %36 : vector<4x2x64xf32>
    %38 = vector.extract_strided_slice %1 {offsets = [0, 4, 0], sizes = [4, 2, 64], strides = [1, 1, 1]} : vector<4x8x64xf32> to vector<4x2x64xf32>
    %39 = vector.shape_cast %38 : vector<4x2x64xf32> to vector<1x4x2x64xf32>
    %cst_12 = arith.constant dense<0.000000e+00> : vector<1xf32>
    %40 = vector.multi_reduction <add>, %39, %cst_12 [1, 2, 3] : vector<1x4x2x64xf32> to vector<1xf32>
    %41 = vector.shape_cast %40 : vector<1xf32> to vector<1x1x1x1xf32>
    %42 = vector.extract %41[0, 0, 0, 0] : f32 from vector<1x1x1x1xf32>
    %cst_13 = arith.constant 0.001953125 : f32
    %43 = arith.mulf %42, %cst_13 : f32
    %44 = vector.broadcast %43 : f32 to vector<4x2x64xf32>
    %45 = arith.subf %38, %44 : vector<4x2x64xf32>
    %46 = arith.mulf %45, %45 : vector<4x2x64xf32>
    %47 = vector.shape_cast %46 : vector<4x2x64xf32> to vector<1x4x2x64xf32>
    %cst_14 = arith.constant dense<0.000000e+00> : vector<1xf32>
    %48 = vector.multi_reduction <add>, %47, %cst_14 [1, 2, 3] : vector<1x4x2x64xf32> to vector<1xf32>
    %49 = vector.shape_cast %48 : vector<1xf32> to vector<1x1x1x1xf32>
    %50 = vector.extract %49[0, 0, 0, 0] : f32 from vector<1x1x1x1xf32>
    %cst_15 = arith.constant 0.001953125 : f32
    %51 = arith.mulf %50, %cst_15 : f32
    %cst_16 = arith.constant 9.99999974E-6 : f32
    %52 = arith.addf %51, %cst_16 : f32
    %53 = math.rsqrt %52 : f32
    %54 = vector.broadcast %53 : f32 to vector<4x2x64xf32>
    %55 = arith.mulf %45, %54 : vector<4x2x64xf32>
    %56 = vector.extract_strided_slice %1 {offsets = [0, 6, 0], sizes = [4, 2, 64], strides = [1, 1, 1]} : vector<4x8x64xf32> to vector<4x2x64xf32>
    %57 = vector.shape_cast %56 : vector<4x2x64xf32> to vector<1x4x2x64xf32>
    %cst_17 = arith.constant dense<0.000000e+00> : vector<1xf32>
    %58 = vector.multi_reduction <add>, %57, %cst_17 [1, 2, 3] : vector<1x4x2x64xf32> to vector<1xf32>
    %59 = vector.shape_cast %58 : vector<1xf32> to vector<1x1x1x1xf32>
    %60 = vector.extract %59[0, 0, 0, 0] : f32 from vector<1x1x1x1xf32>
    %cst_18 = arith.constant 0.001953125 : f32
    %61 = arith.mulf %60, %cst_18 : f32
    %62 = vector.broadcast %61 : f32 to vector<4x2x64xf32>
    %63 = arith.subf %56, %62 : vector<4x2x64xf32>
    %64 = arith.mulf %63, %63 : vector<4x2x64xf32>
    %65 = vector.shape_cast %64 : vector<4x2x64xf32> to vector<1x4x2x64xf32>
    %cst_19 = arith.constant dense<0.000000e+00> : vector<1xf32>
    %66 = vector.multi_reduction <add>, %65, %cst_19 [1, 2, 3] : vector<1x4x2x64xf32> to vector<1xf32>
    %67 = vector.shape_cast %66 : vector<1xf32> to vector<1x1x1x1xf32>
    %68 = vector.extract %67[0, 0, 0, 0] : f32 from vector<1x1x1x1xf32>
    %cst_20 = arith.constant 0.001953125 : f32
    %69 = arith.mulf %68, %cst_20 : f32
    %cst_21 = arith.constant 9.99999974E-6 : f32
    %70 = arith.addf %69, %cst_21 : f32
    %71 = math.rsqrt %70 : f32
    %72 = vector.broadcast %71 : f32 to vector<4x2x64xf32>
    %73 = arith.mulf %63, %72 : vector<4x2x64xf32>
    %74 = tpu.concatenate %19, %37, %55, %73 in 1 : vector<4x2x64xf32>, vector<4x2x64xf32>, vector<4x2x64xf32>, vector<4x2x64xf32> -> vector<4x8x64xf32>
    %c0_22 = arith.constant 0 : index
    %c0_23 = arith.constant 0 : index
    %75 = vector.load %arg3[%c0_22, %c0_23] : memref<8x1xf32, #tpu.memory_space<vmem>>, vector<8x1xf32>
    %76 = vector.shape_cast %75 : vector<8x1xf32> to vector<1x8x1xf32>
    %77 = vector.broadcast %76 : vector<1x8x1xf32> to vector<4x8x64xf32>
    %78 = arith.mulf %74, %77 : vector<4x8x64xf32>
    %c0_24 = arith.constant 0 : index
    %c0_25 = arith.constant 0 : index
    %79 = vector.load %arg4[%c0_24, %c0_25] : memref<8x1xf32, #tpu.memory_space<vmem>>, vector<8x1xf32>
    %80 = vector.shape_cast %79 : vector<8x1xf32> to vector<1x8x1xf32>
    %81 = vector.broadcast %80 : vector<1x8x1xf32> to vector<4x8x64xf32>
    %82 = arith.addf %78, %81 : vector<4x8x64xf32>
    %cst_26 = arith.constant 0.000000e+00 : f32
    %83 = vector.broadcast %cst_26 : f32 to vector<4x8x64xf32>
    %84 = arith.minimumf %82, %83 : vector<4x8x64xf32>
    %cst_27 = arith.constant 0.000000e+00 : f32
    %85 = vector.broadcast %cst_27 : f32 to vector<4x8x64xf32>
    %86 = arith.cmpf ogt, %82, %85 : vector<4x8x64xf32>
    %87 = math.exp %84 : vector<4x8x64xf32>
    %cst_28 = arith.constant 1.000000e+00 : f32
    %88 = vector.broadcast %cst_28 : f32 to vector<4x8x64xf32>
    %89 = arith.subf %87, %88 : vector<4x8x64xf32>
    %cst_29 = arith.constant 1.67326319 : f32
    %90 = vector.broadcast %cst_29 : f32 to vector<4x8x64xf32>
    %91 = arith.mulf %90, %89 : vector<4x8x64xf32>
    %92 = arith.select %86, %82, %91 : vector<4x8x64xi1>, vector<4x8x64xf32>
    %cst_30 = arith.constant 1.05070102 : f32
    %93 = vector.broadcast %cst_30 : f32 to vector<4x8x64xf32>
    %94 = arith.mulf %93, %92 : vector<4x8x64xf32>
    %cst_31 = arith.constant dense<0.000000e+00> : vector<8x64xf32>
    %95 = vector.multi_reduction <add>, %94, %cst_31 [0] : vector<4x8x64xf32> to vector<8x64xf32>
    %cst_32 = arith.constant 2.500000e-01 : f32
    %96 = vector.broadcast %cst_32 : f32 to vector<8x64xf32>
    %97 = arith.mulf %95, %96 : vector<8x64xf32>
    %c0_33 = arith.constant 0 : index
    %c0_34 = arith.constant 0 : index
    %c0_35 = arith.constant 0 : index
    %98 = vector.load %arg2[%c0_33, %c0_34, %c0_35] : memref<1x1x32xf32, #tpu.memory_space<vmem>>, vector<1x1x32xf32>
    %99 = vector.shape_cast %98 : vector<1x1x32xf32> to vector<1x32xf32>
    %cst_36 = arith.constant 0.000000e+00 : f32
    %100 = vector.broadcast %cst_36 : f32 to vector<1x32xf32>
    %101 = arith.minimumf %99, %100 : vector<1x32xf32>
    %cst_37 = arith.constant 0.000000e+00 : f32
    %102 = vector.broadcast %cst_37 : f32 to vector<1x32xf32>
    %103 = arith.cmpf ogt, %99, %102 : vector<1x32xf32>
    %104 = math.exp %101 : vector<1x32xf32>
    %cst_38 = arith.constant 1.000000e+00 : f32
    %105 = vector.broadcast %cst_38 : f32 to vector<1x32xf32>
    %106 = arith.subf %104, %105 : vector<1x32xf32>
    %cst_39 = arith.constant 1.67326319 : f32
    %107 = vector.broadcast %cst_39 : f32 to vector<1x32xf32>
    %108 = arith.mulf %107, %106 : vector<1x32xf32>
    %109 = arith.select %103, %99, %108 : vector<1x32xi1>, vector<1x32xf32>
    %cst_40 = arith.constant 1.05070102 : f32
    %110 = vector.broadcast %cst_40 : f32 to vector<1x32xf32>
    %111 = arith.mulf %110, %109 : vector<1x32xf32>
    %c0_41 = arith.constant 0 : index
    %c0_42 = arith.constant 0 : index
    %112 = vector.load %arg5[%c0_41, %c0_42] : memref<8x32xf32, #tpu.memory_space<vmem>>, vector<8x32xf32>
    %113 = vector.broadcast %111 : vector<1x32xf32> to vector<8x32xf32>
    %114 = arith.mulf %112, %113 : vector<8x32xf32>
    %cst_43 = arith.constant dense<0.000000e+00> : vector<8xf32>
    %115 = vector.multi_reduction <add>, %114, %cst_43 [1] : vector<8x32xf32> to vector<8xf32>
    %116 = vector.shape_cast %115 : vector<8xf32> to vector<8x1xf32>
    %c0_44 = arith.constant 0 : index
    %c0_45 = arith.constant 0 : index
    %117 = vector.load %arg6[%c0_44, %c0_45] : memref<8x1xf32, #tpu.memory_space<vmem>>, vector<8x1xf32>
    %118 = arith.addf %116, %117 : vector<8x1xf32>
    %119 = vector.broadcast %118 : vector<8x1xf32> to vector<8x64xf32>
    %120 = arith.addf %97, %119 : vector<8x64xf32>
    %121 = vector.extract_strided_slice %120 {offsets = [0, 0], sizes = [2, 64], strides = [1, 1]} : vector<8x64xf32> to vector<2x64xf32>
    %122 = vector.shape_cast %121 : vector<2x64xf32> to vector<1x2x64xf32>
    %cst_46 = arith.constant dense<0.000000e+00> : vector<1xf32>
    %123 = vector.multi_reduction <add>, %122, %cst_46 [1, 2] : vector<1x2x64xf32> to vector<1xf32>
    %124 = vector.shape_cast %123 : vector<1xf32> to vector<1x1x1xf32>
    %125 = vector.extract %124[0, 0, 0] : f32 from vector<1x1x1xf32>
    %cst_47 = arith.constant 7.812500e-03 : f32
    %126 = arith.mulf %125, %cst_47 : f32
    %127 = vector.broadcast %126 : f32 to vector<2x64xf32>
    %128 = arith.subf %121, %127 : vector<2x64xf32>
    %129 = arith.mulf %128, %128 : vector<2x64xf32>
    %130 = vector.shape_cast %129 : vector<2x64xf32> to vector<1x2x64xf32>
    %cst_48 = arith.constant dense<0.000000e+00> : vector<1xf32>
    %131 = vector.multi_reduction <add>, %130, %cst_48 [1, 2] : vector<1x2x64xf32> to vector<1xf32>
    %132 = vector.shape_cast %131 : vector<1xf32> to vector<1x1x1xf32>
    %133 = vector.extract %132[0, 0, 0] : f32 from vector<1x1x1xf32>
    %cst_49 = arith.constant 7.812500e-03 : f32
    %134 = arith.mulf %133, %cst_49 : f32
    %cst_50 = arith.constant 9.99999974E-6 : f32
    %135 = arith.addf %134, %cst_50 : f32
    %136 = math.rsqrt %135 : f32
    %137 = vector.broadcast %136 : f32 to vector<2x64xf32>
    %138 = arith.mulf %128, %137 : vector<2x64xf32>
    %139 = vector.extract_strided_slice %120 {offsets = [2, 0], sizes = [2, 64], strides = [1, 1]} : vector<8x64xf32> to vector<2x64xf32>
    %140 = vector.shape_cast %139 : vector<2x64xf32> to vector<1x2x64xf32>
    %cst_51 = arith.constant dense<0.000000e+00> : vector<1xf32>
    %141 = vector.multi_reduction <add>, %140, %cst_51 [1, 2] : vector<1x2x64xf32> to vector<1xf32>
    %142 = vector.shape_cast %141 : vector<1xf32> to vector<1x1x1xf32>
    %143 = vector.extract %142[0, 0, 0] : f32 from vector<1x1x1xf32>
    %cst_52 = arith.constant 7.812500e-03 : f32
    %144 = arith.mulf %143, %cst_52 : f32
    %145 = vector.broadcast %144 : f32 to vector<2x64xf32>
    %146 = arith.subf %139, %145 : vector<2x64xf32>
    %147 = arith.mulf %146, %146 : vector<2x64xf32>
    %148 = vector.shape_cast %147 : vector<2x64xf32> to vector<1x2x64xf32>
    %cst_53 = arith.constant dense<0.000000e+00> : vector<1xf32>
    %149 = vector.multi_reduction <add>, %148, %cst_53 [1, 2] : vector<1x2x64xf32> to vector<1xf32>
    %150 = vector.shape_cast %149 : vector<1xf32> to vector<1x1x1xf32>
    %151 = vector.extract %150[0, 0, 0] : f32 from vector<1x1x1xf32>
    %cst_54 = arith.constant 7.812500e-03 : f32
    %152 = arith.mulf %151, %cst_54 : f32
    %cst_55 = arith.constant 9.99999974E-6 : f32
    %153 = arith.addf %152, %cst_55 : f32
    %154 = math.rsqrt %153 : f32
    %155 = vector.broadcast %154 : f32 to vector<2x64xf32>
    %156 = arith.mulf %146, %155 : vector<2x64xf32>
    %157 = vector.extract_strided_slice %120 {offsets = [4, 0], sizes = [2, 64], strides = [1, 1]} : vector<8x64xf32> to vector<2x64xf32>
    %158 = vector.shape_cast %157 : vector<2x64xf32> to vector<1x2x64xf32>
    %cst_56 = arith.constant dense<0.000000e+00> : vector<1xf32>
    %159 = vector.multi_reduction <add>, %158, %cst_56 [1, 2] : vector<1x2x64xf32> to vector<1xf32>
    %160 = vector.shape_cast %159 : vector<1xf32> to vector<1x1x1xf32>
    %161 = vector.extract %160[0, 0, 0] : f32 from vector<1x1x1xf32>
    %cst_57 = arith.constant 7.812500e-03 : f32
    %162 = arith.mulf %161, %cst_57 : f32
    %163 = vector.broadcast %162 : f32 to vector<2x64xf32>
    %164 = arith.subf %157, %163 : vector<2x64xf32>
    %165 = arith.mulf %164, %164 : vector<2x64xf32>
    %166 = vector.shape_cast %165 : vector<2x64xf32> to vector<1x2x64xf32>
    %cst_58 = arith.constant dense<0.000000e+00> : vector<1xf32>
    %167 = vector.multi_reduction <add>, %166, %cst_58 [1, 2] : vector<1x2x64xf32> to vector<1xf32>
    %168 = vector.shape_cast %167 : vector<1xf32> to vector<1x1x1xf32>
    %169 = vector.extract %168[0, 0, 0] : f32 from vector<1x1x1xf32>
    %cst_59 = arith.constant 7.812500e-03 : f32
    %170 = arith.mulf %169, %cst_59 : f32
    %cst_60 = arith.constant 9.99999974E-6 : f32
    %171 = arith.addf %170, %cst_60 : f32
    %172 = math.rsqrt %171 : f32
    %173 = vector.broadcast %172 : f32 to vector<2x64xf32>
    %174 = arith.mulf %164, %173 : vector<2x64xf32>
    %175 = vector.extract_strided_slice %120 {offsets = [6, 0], sizes = [2, 64], strides = [1, 1]} : vector<8x64xf32> to vector<2x64xf32>
    %176 = vector.shape_cast %175 : vector<2x64xf32> to vector<1x2x64xf32>
    %cst_61 = arith.constant dense<0.000000e+00> : vector<1xf32>
    %177 = vector.multi_reduction <add>, %176, %cst_61 [1, 2] : vector<1x2x64xf32> to vector<1xf32>
    %178 = vector.shape_cast %177 : vector<1xf32> to vector<1x1x1xf32>
    %179 = vector.extract %178[0, 0, 0] : f32 from vector<1x1x1xf32>
    %cst_62 = arith.constant 7.812500e-03 : f32
    %180 = arith.mulf %179, %cst_62 : f32
    %181 = vector.broadcast %180 : f32 to vector<2x64xf32>
    %182 = arith.subf %175, %181 : vector<2x64xf32>
    %183 = arith.mulf %182, %182 : vector<2x64xf32>
    %184 = vector.shape_cast %183 : vector<2x64xf32> to vector<1x2x64xf32>
    %cst_63 = arith.constant dense<0.000000e+00> : vector<1xf32>
    %185 = vector.multi_reduction <add>, %184, %cst_63 [1, 2] : vector<1x2x64xf32> to vector<1xf32>
    %186 = vector.shape_cast %185 : vector<1xf32> to vector<1x1x1xf32>
    %187 = vector.extract %186[0, 0, 0] : f32 from vector<1x1x1xf32>
    %cst_64 = arith.constant 7.812500e-03 : f32
    %188 = arith.mulf %187, %cst_64 : f32
    %cst_65 = arith.constant 9.99999974E-6 : f32
    %189 = arith.addf %188, %cst_65 : f32
    %190 = math.rsqrt %189 : f32
    %191 = vector.broadcast %190 : f32 to vector<2x64xf32>
    %192 = arith.mulf %182, %191 : vector<2x64xf32>
    %193 = tpu.concatenate %138, %156, %174, %192 in 0 : vector<2x64xf32>, vector<2x64xf32>, vector<2x64xf32>, vector<2x64xf32> -> vector<8x64xf32>
    %c0_66 = arith.constant 0 : index
    %c0_67 = arith.constant 0 : index
    %194 = vector.load %arg7[%c0_66, %c0_67] : memref<8x1xf32, #tpu.memory_space<vmem>>, vector<8x1xf32>
    %195 = vector.broadcast %194 : vector<8x1xf32> to vector<8x64xf32>
    %196 = arith.mulf %193, %195 : vector<8x64xf32>
    %c0_68 = arith.constant 0 : index
    %c0_69 = arith.constant 0 : index
    %197 = vector.load %arg8[%c0_68, %c0_69] : memref<8x1xf32, #tpu.memory_space<vmem>>, vector<8x1xf32>
    %198 = vector.broadcast %197 : vector<8x1xf32> to vector<8x64xf32>
    %199 = arith.addf %196, %198 : vector<8x64xf32>
    %cst_70 = arith.constant 0.000000e+00 : f32
    %200 = vector.broadcast %cst_70 : f32 to vector<8x64xf32>
    %201 = arith.minimumf %199, %200 : vector<8x64xf32>
    %cst_71 = arith.constant 0.000000e+00 : f32
    %202 = vector.broadcast %cst_71 : f32 to vector<8x64xf32>
    %203 = arith.cmpf ogt, %199, %202 : vector<8x64xf32>
    %204 = math.exp %201 : vector<8x64xf32>
    %cst_72 = arith.constant 1.000000e+00 : f32
    %205 = vector.broadcast %cst_72 : f32 to vector<8x64xf32>
    %206 = arith.subf %204, %205 : vector<8x64xf32>
    %cst_73 = arith.constant 1.67326319 : f32
    %207 = vector.broadcast %cst_73 : f32 to vector<8x64xf32>
    %208 = arith.mulf %207, %206 : vector<8x64xf32>
    %209 = arith.select %203, %199, %208 : vector<8x64xi1>, vector<8x64xf32>
    %cst_74 = arith.constant 1.05070102 : f32
    %210 = vector.broadcast %cst_74 : f32 to vector<8x64xf32>
    %211 = arith.mulf %210, %209 : vector<8x64xf32>
    %cst_75 = arith.constant 0.000000e+00 : f32
    %212 = vector.broadcast %cst_75 : f32 to vector<8x9xf32>
    %213 = vector.extract_strided_slice %211 {offsets = [0, 0], sizes = [8, 55], strides = [1, 1]} : vector<8x64xf32> to vector<8x55xf32>
    %214 = tpu.concatenate %212, %213 in 1 : vector<8x9xf32>, vector<8x55xf32> -> vector<8x64xf32>
    %c0_76 = arith.constant 0 : index
    %c0_77 = arith.constant 0 : index
    %c0_78 = arith.constant 0 : index
    %215 = vector.load %arg11[%c0_76, %c0_77, %c0_78] : memref<9x1x64xf32, #tpu.memory_space<vmem>>, vector<1x1x64xf32>
    %216 = vector.shape_cast %215 : vector<1x1x64xf32> to vector<1x64xf32>
    %217 = vector.broadcast %216 : vector<1x64xf32> to vector<8x64xf32>
    %218 = arith.mulf %214, %217 : vector<8x64xf32>
    %cst_79 = arith.constant 0.000000e+00 : f32
    %219 = vector.broadcast %cst_79 : f32 to vector<8x8xf32>
    %220 = vector.extract_strided_slice %211 {offsets = [0, 0], sizes = [8, 56], strides = [1, 1]} : vector<8x64xf32> to vector<8x56xf32>
    %221 = tpu.concatenate %219, %220 in 1 : vector<8x8xf32>, vector<8x56xf32> -> vector<8x64xf32>
    %c1 = arith.constant 1 : index
    %c0_80 = arith.constant 0 : index
    %c0_81 = arith.constant 0 : index
    %222 = vector.load %arg11[%c1, %c0_80, %c0_81] : memref<9x1x64xf32, #tpu.memory_space<vmem>>, vector<1x1x64xf32>
    %223 = vector.shape_cast %222 : vector<1x1x64xf32> to vector<1x64xf32>
    %224 = vector.broadcast %223 : vector<1x64xf32> to vector<8x64xf32>
    %225 = arith.mulf %221, %224 : vector<8x64xf32>
    %cst_82 = arith.constant 0.000000e+00 : f32
    %226 = vector.broadcast %cst_82 : f32 to vector<8x7xf32>
    %227 = vector.extract_strided_slice %211 {offsets = [0, 0], sizes = [8, 57], strides = [1, 1]} : vector<8x64xf32> to vector<8x57xf32>
    %228 = tpu.concatenate %226, %227 in 1 : vector<8x7xf32>, vector<8x57xf32> -> vector<8x64xf32>
    %c2 = arith.constant 2 : index
    %c0_83 = arith.constant 0 : index
    %c0_84 = arith.constant 0 : index
    %229 = vector.load %arg11[%c2, %c0_83, %c0_84] : memref<9x1x64xf32, #tpu.memory_space<vmem>>, vector<1x1x64xf32>
    %230 = vector.shape_cast %229 : vector<1x1x64xf32> to vector<1x64xf32>
    %231 = vector.broadcast %230 : vector<1x64xf32> to vector<8x64xf32>
    %232 = arith.mulf %228, %231 : vector<8x64xf32>
    %cst_85 = arith.constant 0.000000e+00 : f32
    %233 = vector.broadcast %cst_85 : f32 to vector<8x1xf32>
    %234 = vector.extract_strided_slice %211 {offsets = [0, 0], sizes = [8, 63], strides = [1, 1]} : vector<8x64xf32> to vector<8x63xf32>
    %235 = tpu.concatenate %233, %234 in 1 : vector<8x1xf32>, vector<8x63xf32> -> vector<8x64xf32>
    %c3 = arith.constant 3 : index
    %c0_86 = arith.constant 0 : index
    %c0_87 = arith.constant 0 : index
    %236 = vector.load %arg11[%c3, %c0_86, %c0_87] : memref<9x1x64xf32, #tpu.memory_space<vmem>>, vector<1x1x64xf32>
    %237 = vector.shape_cast %236 : vector<1x1x64xf32> to vector<1x64xf32>
    %238 = vector.broadcast %237 : vector<1x64xf32> to vector<8x64xf32>
    %239 = arith.mulf %235, %238 : vector<8x64xf32>
    %c4 = arith.constant 4 : index
    %c0_88 = arith.constant 0 : index
    %c0_89 = arith.constant 0 : index
    %240 = vector.load %arg11[%c4, %c0_88, %c0_89] : memref<9x1x64xf32, #tpu.memory_space<vmem>>, vector<1x1x64xf32>
    %241 = vector.shape_cast %240 : vector<1x1x64xf32> to vector<1x64xf32>
    %242 = vector.broadcast %241 : vector<1x64xf32> to vector<8x64xf32>
    %243 = arith.mulf %211, %242 : vector<8x64xf32>
    %244 = vector.extract_strided_slice %211 {offsets = [0, 1], sizes = [8, 63], strides = [1, 1]} : vector<8x64xf32> to vector<8x63xf32>
    %cst_90 = arith.constant 0.000000e+00 : f32
    %245 = vector.broadcast %cst_90 : f32 to vector<8x1xf32>
    %246 = tpu.concatenate %244, %245 in 1 : vector<8x63xf32>, vector<8x1xf32> -> vector<8x64xf32>
    %c5 = arith.constant 5 : index
    %c0_91 = arith.constant 0 : index
    %c0_92 = arith.constant 0 : index
    %247 = vector.load %arg11[%c5, %c0_91, %c0_92] : memref<9x1x64xf32, #tpu.memory_space<vmem>>, vector<1x1x64xf32>
    %248 = vector.shape_cast %247 : vector<1x1x64xf32> to vector<1x64xf32>
    %249 = vector.broadcast %248 : vector<1x64xf32> to vector<8x64xf32>
    %250 = arith.mulf %246, %249 : vector<8x64xf32>
    %251 = vector.extract_strided_slice %211 {offsets = [0, 7], sizes = [8, 57], strides = [1, 1]} : vector<8x64xf32> to vector<8x57xf32>
    %cst_93 = arith.constant 0.000000e+00 : f32
    %252 = vector.broadcast %cst_93 : f32 to vector<8x7xf32>
    %253 = tpu.concatenate %251, %252 in 1 : vector<8x57xf32>, vector<8x7xf32> -> vector<8x64xf32>
    %c6 = arith.constant 6 : index
    %c0_94 = arith.constant 0 : index
    %c0_95 = arith.constant 0 : index
    %254 = vector.load %arg11[%c6, %c0_94, %c0_95] : memref<9x1x64xf32, #tpu.memory_space<vmem>>, vector<1x1x64xf32>
    %255 = vector.shape_cast %254 : vector<1x1x64xf32> to vector<1x64xf32>
    %256 = vector.broadcast %255 : vector<1x64xf32> to vector<8x64xf32>
    %257 = arith.mulf %253, %256 : vector<8x64xf32>
    %258 = vector.extract_strided_slice %211 {offsets = [0, 8], sizes = [8, 56], strides = [1, 1]} : vector<8x64xf32> to vector<8x56xf32>
    %cst_96 = arith.constant 0.000000e+00 : f32
    %259 = vector.broadcast %cst_96 : f32 to vector<8x8xf32>
    %260 = tpu.concatenate %258, %259 in 1 : vector<8x56xf32>, vector<8x8xf32> -> vector<8x64xf32>
    %c7 = arith.constant 7 : index
    %c0_97 = arith.constant 0 : index
    %c0_98 = arith.constant 0 : index
    %261 = vector.load %arg11[%c7, %c0_97, %c0_98] : memref<9x1x64xf32, #tpu.memory_space<vmem>>, vector<1x1x64xf32>
    %262 = vector.shape_cast %261 : vector<1x1x64xf32> to vector<1x64xf32>
    %263 = vector.broadcast %262 : vector<1x64xf32> to vector<8x64xf32>
    %264 = arith.mulf %260, %263 : vector<8x64xf32>
    %265 = vector.extract_strided_slice %211 {offsets = [0, 9], sizes = [8, 55], strides = [1, 1]} : vector<8x64xf32> to vector<8x55xf32>
    %cst_99 = arith.constant 0.000000e+00 : f32
    %266 = vector.broadcast %cst_99 : f32 to vector<8x9xf32>
    %267 = tpu.concatenate %265, %266 in 1 : vector<8x55xf32>, vector<8x9xf32> -> vector<8x64xf32>
    %c8 = arith.constant 8 : index
    %c0_100 = arith.constant 0 : index
    %c0_101 = arith.constant 0 : index
    %268 = vector.load %arg11[%c8, %c0_100, %c0_101] : memref<9x1x64xf32, #tpu.memory_space<vmem>>, vector<1x1x64xf32>
    %269 = vector.shape_cast %268 : vector<1x1x64xf32> to vector<1x64xf32>
    %270 = vector.broadcast %269 : vector<1x64xf32> to vector<8x64xf32>
    %271 = arith.mulf %267, %270 : vector<8x64xf32>
    %272 = tpu.concatenate %218, %225, %232, %239, %243, %250, %257, %264, %271 in 0 : vector<8x64xf32>, vector<8x64xf32>, vector<8x64xf32>, vector<8x64xf32>, vector<8x64xf32>, vector<8x64xf32>, vector<8x64xf32>, vector<8x64xf32>, vector<8x64xf32> -> vector<72x64xf32>
    %c0_102 = arith.constant 0 : index
    %c0_103 = arith.constant 0 : index
    %273 = vector.load %arg9[%c0_102, %c0_103] : memref<8x72xf32, #tpu.memory_space<vmem>>, vector<8x72xf32>
    %cst_104 = arith.constant dense<0.000000e+00> : vector<8x64xf32>
    %274 = tpu.matmul %273, %272, %cst_104 {dimension_numbers = #tpu.dot_dimension_numbers<[1], [0], [0], [1], [0, 0, 1, 1], [], []>} : vector<8x72xf32>, vector<72x64xf32>, vector<8x64xf32> -> vector<8x64xf32>
    %c0_105 = arith.constant 0 : index
    %c0_106 = arith.constant 0 : index
    %275 = vector.load %arg10[%c0_105, %c0_106] : memref<8x1xf32, #tpu.memory_space<vmem>>, vector<8x1xf32>
    %276 = vector.broadcast %275 : vector<8x1xf32> to vector<8x64xf32>
    %277 = arith.addf %274, %276 : vector<8x64xf32>
    %278 = arith.addf %277, %120 : vector<8x64xf32>
    %c0_107 = arith.constant 0 : index
    %c0_108 = arith.constant 0 : index
    %c0_109 = arith.constant 0 : index
    %279 = vector.load %arg12[%c0_107, %c0_108, %c0_109] : memref<1x8x64xf32, #tpu.memory_space<vmem>>, vector<1x8x64xf32>
    %280 = vector.shape_cast %279 : vector<1x8x64xf32> to vector<8x64xf32>
    %281 = vector.shape_cast %278 : vector<8x64xf32> to vector<1x8x64xf32>
    tpu.vector_store %arg12[%c0_107, %c0_108, %c0_109], %281 {strides = array<i32>} : memref<1x8x64xf32, #tpu.memory_space<vmem>>, vector<1x8x64xf32>,
    return
  }
  func.func @transform_0(%arg0: i32) -> (i32, i32, i32, i32) {
    %c0_i32 = arith.constant 0 : i32
    %c0_i32_0 = arith.constant 0 : i32
    %c0_i32_1 = arith.constant 0 : i32
    %c0_i32_2 = arith.constant 0 : i32
    return %arg0, %c0_i32, %c0_i32_0, %c0_i32_1 : i32, i32, i32, i32
  }
  func.func @transform_1(%arg0: i32) -> (i32, i32, i32) {
    %c0_i32 = arith.constant 0 : i32
    %c0_i32_0 = arith.constant 0 : i32
    %c0_i32_1 = arith.constant 0 : i32
    return %arg0, %c0_i32, %c0_i32_0 : i32, i32, i32
  }
  func.func @transform_2(%arg0: i32) -> (i32, i32) {
    %c0_i32 = arith.constant 0 : i32
    %c0_i32_0 = arith.constant 0 : i32
    %c0_i32_1 = arith.constant 0 : i32
    return %c0_i32, %c0_i32_0 : i32, i32
  }
  func.func @transform_3(%arg0: i32) -> (i32, i32) {
    %c0_i32 = arith.constant 0 : i32
    %c0_i32_0 = arith.constant 0 : i32
    %c0_i32_1 = arith.constant 0 : i32
    return %c0_i32, %c0_i32_0 : i32, i32
  }
  func.func @transform_4(%arg0: i32) -> (i32, i32) {
    %c0_i32 = arith.constant 0 : i32
    %c0_i32_0 = arith.constant 0 : i32
    %c0_i32_1 = arith.constant 0 : i32
    return %c0_i32, %c0_i32_0 : i32, i32
  }
  func.func @transform_5(%arg0: i32) -> (i32, i32) {
    %c0_i32 = arith.constant 0 : i32
    %c0_i32_0 = arith.constant 0 : i32
    %c0_i32_1 = arith.constant 0 : i32
    return %c0_i32, %c0_i32_0 : i32, i32
  }
  func.func @transform_6(%arg0: i32) -> (i32, i32) {
    %c0_i32 = arith.constant 0 : i32
    %c0_i32_0 = arith.constant 0 : i32
    %c0_i32_1 = arith.constant 0 : i32
    return %c0_i32, %c0_i32_0 : i32, i32
  }
  func.func @transform_7(%arg0: i32) -> (i32, i32) {
    %c0_i32 = arith.constant 0 : i32
    %c0_i32_0 = arith.constant 0 : i32
    %c0_i32_1 = arith.constant 0 : i32
    return %c0_i32, %c0_i32_0 : i32, i32
  }
  func.func @transform_8(%arg0: i32) -> (i32, i32) {
    %c0_i32 = arith.constant 0 : i32
    %c0_i32_0 = arith.constant 0 : i32
    %c0_i32_1 = arith.constant 0 : i32
    return %c0_i32, %c0_i32_0 : i32, i32
  }
  func.func @transform_9(%arg0: i32) -> (i32, i32) {
    %c0_i32 = arith.constant 0 : i32
    %c0_i32_0 = arith.constant 0 : i32
    %c0_i32_1 = arith.constant 0 : i32
    return %c0_i32, %c0_i32_0 : i32, i32
  }
  func.func @transform_10(%arg0: i32) -> (i32, i32, i32) {
    %c0_i32 = arith.constant 0 : i32
    %c0_i32_0 = arith.constant 0 : i32
    %c0_i32_1 = arith.constant 0 : i32
    %c0_i32_2 = arith.constant 0 : i32
    return %c0_i32, %c0_i32_0, %c0_i32_1 : i32, i32, i32
  }
  func.func @transform_11(%arg0: i32) -> (i32, i32, i32) {
    %c0_i32 = arith.constant 0 : i32
    %c0_i32_0 = arith.constant 0 : i32
    %c0_i32_1 = arith.constant 0 : i32
    return %arg0, %c0_i32, %c0_i32_0 : i32, i32, i32
  }
}

</mosaic_0001>

<llo_original>
// kernel: tpu_custom_call.1
$region0: #{tpu_custom_call.1}
  #allocation0 [shape = 'u32[]', space=smem, size = 0x4, offset = 0x4, fixed_abs, tag = 'smem constant byte address 0x4 - core index']
  #allocation1 [shape = 'u32[144,128]{1,0:T(1,128)}', space=vmem, size = 0x12000, scoped, tag = 'internal scratch']
  %s0 = inlined_call_operand.hbm [shape: f32[2,4,8,64], index: 0, kind: input, shape index: {}]
  %s1 = inlined_call_operand.vmem [shape: f32[2,1,32], index: 1, kind: input, shape index: {}]
  %s2 = inlined_call_operand.vmem [shape: f32[8,1], index: 2, kind: input, shape index: {}]
  %s3 = inlined_call_operand.vmem [shape: f32[8,1], index: 3, kind: input, shape index: {}]
  %s4 = inlined_call_operand.vmem [shape: f32[8,32], index: 4, kind: input, shape index: {}]
  %s5 = inlined_call_operand.vmem [shape: f32[8,1], index: 5, kind: input, shape index: {}]
  %s6 = inlined_call_operand.vmem [shape: f32[8,1], index: 6, kind: input, shape index: {}]
  %s7 = inlined_call_operand.vmem [shape: f32[8,1], index: 7, kind: input, shape index: {}]
  %s8 = inlined_call_operand.vmem [shape: f32[8,72], index: 8, kind: input, shape index: {}]
  %s9 = inlined_call_operand.vmem [shape: f32[8,1], index: 9, kind: input, shape index: {}]
  %s10 = inlined_call_operand.vmem [shape: f32[9,1,64], index: 10, kind: input, shape index: {}]
  %s11 = inlined_call_operand.hbm [shape: f32[2,8,64], index: 11, kind: output, shape index: {}]
  %s12 = sld [smem:[#allocation0]]
  $region81: #{tpu_custom_call.1} parent=0
    _
  %s14 = ssub.s32 1, %s12
  %s15 = scalar_select 0, %s14, %s12
  $region1: #{tpu_custom_call.1} parent=0
    #allocation2 [shape = 'u8[32768]{0}', space=vmem, size = 0x8000, scoped, tag = 'input window, operand 0']
    #allocation3 [shape = 's32[2]{0}', space=sflag, size = 0x8, scoped, tag = 'scoped memory for tpu_custom_call.1']
    #allocation4 [shape = 's32[2]{0}', space=sflag, size = 0x8, scoped, tag = 'scoped memory for tpu_custom_call.1']
    #allocation5 [shape = 'u8[8192]{0}', space=vmem, size = 0x2000, scoped, tag = 'output window, operand 0']
    %16 = vsyncpa [#allocation3], 0
    %s17 = scalar_lea.sflag [#allocation3], 1
    %18 = vsyncpa %s17, 0
    %19 = vsyncpa [#allocation4], 0
    %s20 = scalar_lea.sflag [#allocation4], 1
    %21 = vsyncpa %s20, 0
    loop: start=0, step=1, limit=4
    $region2: #{tpu_custom_call.1} parent=1 // loop_pre_header
      _
    $region3: #{tpu_custom_call.1} parent=1 // loop_header
      %s23 = sphi 0, %s27
      %p24 = scmp.ge.s32.totalorder %s23, 4
      %s33 = sphi 0, %s35
      %s36 = sphi 0, %s33
      %s37 = sphi 0, %s36
      %s53 = sphi 0, %s37
      %s59 = sphi 0, %s61
      %s62 = sphi 0, %s59
      %s63 = sphi 0, %s62
      %s79 = sphi 0, %s63
      %s83 = sphi 0, %s83
      %s85 = sphi 0, %s83
      %s86 = sphi 0, %s85
      %s100 = sphi 0, %s86
      %s104 = sphi 0, %s104
      %s106 = sphi 0, %s104
      %s107 = sphi 0, %s106
      %s121 = sphi 0, %s107
      %s125 = sphi 0, %s125
      %s127 = sphi 0, %s125
      %s128 = sphi 0, %s127
      %s142 = sphi 0, %s128
      %s146 = sphi 0, %s146
      %s148 = sphi 0, %s146
      %s149 = sphi 0, %s148
      %s163 = sphi 0, %s149
      %s167 = sphi 0, %s167
      %s169 = sphi 0, %s167
      %s170 = sphi 0, %s169
      %s184 = sphi 0, %s170
      %s188 = sphi 0, %s188
      %s190 = sphi 0, %s188
      %s191 = sphi 0, %s190
      %s205 = sphi 0, %s191
      %s209 = sphi 0, %s209
      %s211 = sphi 0, %s209
      %s212 = sphi 0, %s211
      %s226 = sphi 0, %s212
      %s230 = sphi 0, %s230
      %s232 = sphi 0, %s230
      %s233 = sphi 0, %s232
      %s247 = sphi 0, %s233
      %s251 = sphi 0, %s251
      %s253 = sphi 0, %s251
      %s254 = sphi 0, %s253
      %s268 = sphi 0, %s254
      %s274 = sphi 0, %s276
      %s277 = sphi 0, %s274
      %s278 = sphi 0, %s277
      %s294 = sphi 0, %s278
    $region4: #{tpu_custom_call.1} parent=1 // loop_header_branch
      %26 = sbr.rel (%p24) target = $region8
    $region5: #{tpu_custom_call.1} parent=1 // loop_body
      %s28 = ssub.s32 %s23, 1
      %s29 = ssub.s32 %s23, 2
      %s30 = sadd.s32 %s23, 1
      %s31 = ssub.s32 %s23, %s30
      %p32 = scmp.eq.s32.totalorder %s31, 0
      %s34 = sadd.s32 %s33, 1
      %s35 = scalar_select %p32, %s33, %s34
      %p38 = pneg %p32
      %p39 = scmp.eq.s32.totalorder %s23, 1
      %p40 = por %p38, %p39
      %p41 = scmp.ne.s32.totalorder %s33, %s36
      %p42 = scmp.eq.s32.totalorder %s23, 0
      %p43 = por %p41, %p42
      %p44 = scmp.ne.s32.totalorder %s33, %s36
      %p45 = scmp.eq.s32.totalorder %s28, 1
      %p46 = por %p44, %p45
      %p47 = scmp.ne.s32.totalorder %s36, %s37
      %p48 = scmp.eq.s32.totalorder %s28, 0
      %p49 = por %p47, %p48
      %p50 = scmp.ne.s32.totalorder %s36, %s37
      %p51 = scmp.eq.s32.totalorder %s29, 1
      %p52 = por %p50, %p51
      %p54 = scmp.ne.s32.totalorder %s37, %s53
      %p55 = scmp.eq.s32.totalorder %s29, 0
      %p56 = por %p54, %p55
      %s57 = ssub.s32 %s23, %s30
      %p58 = scmp.eq.s32.totalorder %s57, 0
      %s60 = sadd.s32 %s59, 1
      %s61 = scalar_select %p58, %s59, %s60
      %p64 = pneg %p58
      %p65 = scmp.eq.s32.totalorder %s23, 1
      %p66 = por %p64, %p65
      %p67 = scmp.ne.s32.totalorder %s59, %s62
      %p68 = scmp.eq.s32.totalorder %s23, 0
      %p69 = por %p67, %p68
      %p70 = scmp.ne.s32.totalorder %s59, %s62
      %p71 = scmp.eq.s32.totalorder %s28, 1
      %p72 = por %p70, %p71
      %p73 = scmp.ne.s32.totalorder %s62, %s63
      %p74 = scmp.eq.s32.totalorder %s28, 0
      %p75 = por %p73, %p74
      %p76 = scmp.ne.s32.totalorder %s62, %s63
      %p77 = scmp.eq.s32.totalorder %s29, 1
      %p78 = por %p76, %p77
      %p80 = scmp.ne.s32.totalorder %s63, %s79
      %p81 = scmp.eq.s32.totalorder %s29, 0
      %p82 = por %p80, %p81
      %s84 = sadd.s32 %s83, 1
      %p87 = scmp.eq.s32.totalorder %s23, 1
      %p88 = scmp.ne.s32.totalorder %s83, %s85
      %p89 = scmp.eq.s32.totalorder %s23, 0
      %p90 = por %p88, %p89
      %p91 = scmp.ne.s32.totalorder %s83, %s85
      %p92 = scmp.eq.s32.totalorder %s28, 1
      %p93 = por %p91, %p92
      %p94 = scmp.ne.s32.totalorder %s85, %s86
      %p95 = scmp.eq.s32.totalorder %s28, 0
      %p96 = por %p94, %p95
      %p97 = scmp.ne.s32.totalorder %s85, %s86
      %p98 = scmp.eq.s32.totalorder %s29, 1
      %p99 = por %p97, %p98
      %p101 = scmp.ne.s32.totalorder %s86, %s100
      %p102 = scmp.eq.s32.totalorder %s29, 0
      %p103 = por %p101, %p102
      %s105 = sadd.s32 %s104, 1
      %p108 = scmp.eq.s32.totalorder %s23, 1
      %p109 = scmp.ne.s32.totalorder %s104, %s106
      %p110 = scmp.eq.s32.totalorder %s23, 0
      %p111 = por %p109, %p110
      %p112 = scmp.ne.s32.totalorder %s104, %s106
      %p113 = scmp.eq.s32.totalorder %s28, 1
      %p114 = por %p112, %p113
      %p115 = scmp.ne.s32.totalorder %s106, %s107
      %p116 = scmp.eq.s32.totalorder %s28, 0
      %p117 = por %p115, %p116
      %p118 = scmp.ne.s32.totalorder %s106, %s107
      %p119 = scmp.eq.s32.totalorder %s29, 1
      %p120 = por %p118, %p119
      %p122 = scmp.ne.s32.totalorder %s107, %s121
      %p123 = scmp.eq.s32.totalorder %s29, 0
      %p124 = por %p122, %p123
      %s126 = sadd.s32 %s125, 1
      %p129 = scmp.eq.s32.totalorder %s23, 1
      %p130 = scmp.ne.s32.totalorder %s125, %s127
      %p131 = scmp.eq.s32.totalorder %s23, 0
      %p132 = por %p130, %p131
      %p133 = scmp.ne.s32.totalorder %s125, %s127
      %p134 = scmp.eq.s32.totalorder %s28, 1
      %p135 = por %p133, %p134
      %p136 = scmp.ne.s32.totalorder %s127, %s128
      %p137 = scmp.eq.s32.totalorder %s28, 0
      %p138 = por %p136, %p137
      %p139 = scmp.ne.s32.totalorder %s127, %s128
      %p140 = scmp.eq.s32.totalorder %s29, 1
      %p141 = por %p139, %p140
      %p143 = scmp.ne.s32.totalorder %s128, %s142
      %p144 = scmp.eq.s32.totalorder %s29, 0
      %p145 = por %p143, %p144
      %s147 = sadd.s32 %s146, 1
      %p150 = scmp.eq.s32.totalorder %s23, 1
      %p151 = scmp.ne.s32.totalorder %s146, %s148
      %p152 = scmp.eq.s32.totalorder %s23, 0
      %p153 = por %p151, %p152
      %p154 = scmp.ne.s32.totalorder %s146, %s148
      %p155 = scmp.eq.s32.totalorder %s28, 1
      %p156 = por %p154, %p155
      %p157 = scmp.ne.s32.totalorder %s148, %s149
      %p158 = scmp.eq.s32.totalorder %s28, 0
      %p159 = por %p157, %p158
      %p160 = scmp.ne.s32.totalorder %s148, %s149
      %p161 = scmp.eq.s32.totalorder %s29, 1
      %p162 = por %p160, %p161
      %p164 = scmp.ne.s32.totalorder %s149, %s163
      %p165 = scmp.eq.s32.totalorder %s29, 0
      %p166 = por %p164, %p165
      %s168 = sadd.s32 %s167, 1
      %p171 = scmp.eq.s32.totalorder %s23, 1
      %p172 = scmp.ne.s32.totalorder %s167, %s169
      %p173 = scmp.eq.s32.totalorder %s23, 0
      %p174 = por %p172, %p173
      %p175 = scmp.ne.s32.totalorder %s167, %s169
      %p176 = scmp.eq.s32.totalorder %s28, 1
      %p177 = por %p175, %p176
      %p178 = scmp.ne.s32.totalorder %s169, %s170
      %p179 = scmp.eq.s32.totalorder %s28, 0
      %p180 = por %p178, %p179
      %p181 = scmp.ne.s32.totalorder %s169, %s170
      %p182 = scmp.eq.s32.totalorder %s29, 1
      %p183 = por %p181, %p182
      %p185 = scmp.ne.s32.totalorder %s170, %s184
      %p186 = scmp.eq.s32.totalorder %s29, 0
      %p187 = por %p185, %p186
      %s189 = sadd.s32 %s188, 1
      %p192 = scmp.eq.s32.totalorder %s23, 1
      %p193 = scmp.ne.s32.totalorder %s188, %s190
      %p194 = scmp.eq.s32.totalorder %s23, 0
      %p195 = por %p193, %p194
      %p196 = scmp.ne.s32.totalorder %s188, %s190
      %p197 = scmp.eq.s32.totalorder %s28, 1
      %p198 = por %p196, %p197
      %p199 = scmp.ne.s32.totalorder %s190, %s191
      %p200 = scmp.eq.s32.totalorder %s28, 0
      %p201 = por %p199, %p200
      %p202 = scmp.ne.s32.totalorder %s190, %s191
      %p203 = scmp.eq.s32.totalorder %s29, 1
      %p204 = por %p202, %p203
      %p206 = scmp.ne.s32.totalorder %s191, %s205
      %p207 = scmp.eq.s32.totalorder %s29, 0
      %p208 = por %p206, %p207
      %s210 = sadd.s32 %s209, 1
      %p213 = scmp.eq.s32.totalorder %s23, 1
      %p214 = scmp.ne.s32.totalorder %s209, %s211
      %p215 = scmp.eq.s32.totalorder %s23, 0
      %p216 = por %p214, %p215
      %p217 = scmp.ne.s32.totalorder %s209, %s211
      %p218 = scmp.eq.s32.totalorder %s28, 1
      %p219 = por %p217, %p218
      %p220 = scmp.ne.s32.totalorder %s211, %s212
      %p221 = scmp.eq.s32.totalorder %s28, 0
      %p222 = por %p220, %p221
      %p223 = scmp.ne.s32.totalorder %s211, %s212
      %p224 = scmp.eq.s32.totalorder %s29, 1
      %p225 = por %p223, %p224
      %p227 = scmp.ne.s32.totalorder %s212, %s226
      %p228 = scmp.eq.s32.totalorder %s29, 0
      %p229 = por %p227, %p228
      %s231 = sadd.s32 %s230, 1
      %p234 = scmp.eq.s32.totalorder %s23, 1
      %p235 = scmp.ne.s32.totalorder %s230, %s232
      %p236 = scmp.eq.s32.totalorder %s23, 0
      %p237 = por %p235, %p236
      %p238 = scmp.ne.s32.totalorder %s230, %s232
      %p239 = scmp.eq.s32.totalorder %s28, 1
      %p240 = por %p238, %p239
      %p241 = scmp.ne.s32.totalorder %s232, %s233
      %p242 = scmp.eq.s32.totalorder %s28, 0
      %p243 = por %p241, %p242
      %p244 = scmp.ne.s32.totalorder %s232, %s233
      %p245 = scmp.eq.s32.totalorder %s29, 1
      %p246 = por %p244, %p245
      %p248 = scmp.ne.s32.totalorder %s233, %s247
      %p249 = scmp.eq.s32.totalorder %s29, 0
      %p250 = por %p248, %p249
      %s252 = sadd.s32 %s251, 1
      %p255 = scmp.eq.s32.totalorder %s23, 1
      %p256 = scmp.ne.s32.totalorder %s251, %s253
      %p257 = scmp.eq.s32.totalorder %s23, 0
      %p258 = por %p256, %p257
      %p259 = scmp.ne.s32.totalorder %s251, %s253
      %p260 = scmp.eq.s32.totalorder %s28, 1
      %p261 = por %p259, %p260
      %p262 = scmp.ne.s32.totalorder %s253, %s254
      %p263 = scmp.eq.s32.totalorder %s28, 0
      %p264 = por %p262, %p263
      %p265 = scmp.ne.s32.totalorder %s253, %s254
      %p266 = scmp.eq.s32.totalorder %s29, 1
      %p267 = por %p265, %p266
      %p269 = scmp.ne.s32.totalorder %s254, %s268
      %p270 = scmp.eq.s32.totalorder %s29, 0
      %p271 = por %p269, %p270
      %s272 = ssub.s32 %s23, %s30
      %p273 = scmp.eq.s32.totalorder %s272, 0
      %s275 = sadd.s32 %s274, 1
      %s276 = scalar_select %p273, %s274, %s275
      %p279 = pneg %p273
      %p280 = scmp.eq.s32.totalorder %s23, 1
      %p281 = por %p279, %p280
      %p282 = scmp.ne.s32.totalorder %s274, %s277
      %p283 = scmp.eq.s32.totalorder %s23, 0
      %p284 = por %p282, %p283
      %p285 = scmp.ne.s32.totalorder %s274, %s277
      %p286 = scmp.eq.s32.totalorder %s28, 1
      %p287 = por %p285, %p286
      %p288 = scmp.ne.s32.totalorder %s277, %s278
      %p289 = scmp.eq.s32.totalorder %s28, 0
      %p290 = por %p288, %p289
      %p291 = scmp.ne.s32.totalorder %s277, %s278
      %p292 = scmp.eq.s32.totalorder %s29, 1
      %p293 = por %p291, %p292
      %p295 = scmp.ne.s32.totalorder %s278, %s294
      %p296 = scmp.eq.s32.totalorder %s29, 0
      %p297 = por %p295, %p296
      %p298 = scmp.le.s32.totalorder 1, %s23
      %p299 = scmp.lt.s32.totalorder %s23, 3
      %p300 = pnand %p298, %p299
      %p301 = pneg %p300
      // Predicated region
      $region9: #{tpu_custom_call.1} parent=5 // pred_check
        _
      $region10: #{tpu_custom_call.1} parent=5 // pred_check_branch
        %303 = sbr.rel (%p300) target = $region12
      $region11: #{tpu_custom_call.1} parent=5 // pred_region
        %s304 = ssub.s32 %s23, 1
        // Predicated region
        $region13: #{tpu_custom_call.1} parent=11 // pred_check
          %p305 = pneg %p96
        $region14: #{tpu_custom_call.1} parent=11 // pred_check_branch
          %307 = sbr.rel (%p305) target = $region16
        $region15: #{tpu_custom_call.1} parent=11 // pred_region
          _
        $region16: #{tpu_custom_call.1} parent=11 // pred_fallthru
          _
        // Predicated region
        $region17: #{tpu_custom_call.1} parent=11 // pred_check
          %p308 = pneg %p117
        $region18: #{tpu_custom_call.1} parent=11 // pred_check_branch
          %310 = sbr.rel (%p308) target = $region20
        $region19: #{tpu_custom_call.1} parent=11 // pred_region
          _
        $region20: #{tpu_custom_call.1} parent=11 // pred_fallthru
          _
        // Predicated region
        $region21: #{tpu_custom_call.1} parent=11 // pred_check
          %p311 = pneg %p138
        $region22: #{tpu_custom_call.1} parent=11 // pred_check_branch
          %313 = sbr.rel (%p311) target = $region24
        $region23: #{tpu_custom_call.1} parent=11 // pred_region
          _
        $region24: #{tpu_custom_call.1} parent=11 // pred_fallthru
          _
        // Predicated region
        $region25: #{tpu_custom_call.1} parent=11 // pred_check
          %p314 = pneg %p159
        $region26: #{tpu_custom_call.1} parent=11 // pred_check_branch
          %316 = sbr.rel (%p314) target = $region28
        $region27: #{tpu_custom_call.1} parent=11 // pred_region
          _
        $region28: #{tpu_custom_call.1} parent=11 // pred_fallthru
          _
        // Predicated region
        $region29: #{tpu_custom_call.1} parent=11 // pred_check
          %p317 = pneg %p180
        $region30: #{tpu_custom_call.1} parent=11 // pred_check_branch
          %319 = sbr.rel (%p317) target = $region32
        $region31: #{tpu_custom_call.1} parent=11 // pred_region
          _
        $region32: #{tpu_custom_call.1} parent=11 // pred_fallthru
          _
        // Predicated region
        $region33: #{tpu_custom_call.1} parent=11 // pred_check
          %p320 = pneg %p201
        $region34: #{tpu_custom_call.1} parent=11 // pred_check_branch
          %322 = sbr.rel (%p320) target = $region36
        $region35: #{tpu_custom_call.1} parent=11 // pred_region
          _
        $region36: #{tpu_custom_call.1} parent=11 // pred_fallthru
          _
        // Predicated region
        $region37: #{tpu_custom_call.1} parent=11 // pred_check
          %p323 = pneg %p222
        $region38: #{tpu_custom_call.1} parent=11 // pred_check_branch
          %325 = sbr.rel (%p323) target = $region40
        $region39: #{tpu_custom_call.1} parent=11 // pred_region
          _
        $region40: #{tpu_custom_call.1} parent=11 // pred_fallthru
          _
        // Predicated region
        $region41: #{tpu_custom_call.1} parent=11 // pred_check
          %p326 = pneg %p243
        $region42: #{tpu_custom_call.1} parent=11 // pred_check_branch
          %328 = sbr.rel (%p326) target = $region44
        $region43: #{tpu_custom_call.1} parent=11 // pred_region
          _
        $region44: #{tpu_custom_call.1} parent=11 // pred_fallthru
          _
        // Predicated region
        $region45: #{tpu_custom_call.1} parent=11 // pred_check
          %p329 = pneg %p264
        $region46: #{tpu_custom_call.1} parent=11 // pred_check_branch
          %331 = sbr.rel (%p329) target = $region48
        $region47: #{tpu_custom_call.1} parent=11 // pred_region
          _
        $region48: #{tpu_custom_call.1} parent=11 // pred_fallthru
          _
      $region12: #{tpu_custom_call.1} parent=5 // pred_fallthru
        _
      %p332 = scmp.lt.s32.totalorder %s23, 2
      // Predicated region
      $region49: #{tpu_custom_call.1} parent=5 // pred_check
        %p333 = pneg %p332
      $region50: #{tpu_custom_call.1} parent=5 // pred_check_branch
        %335 = sbr.rel (%p333) target = $region52
      $region51: #{tpu_custom_call.1} parent=5 // pred_region
        // Predicated region
        $region53: #{tpu_custom_call.1} parent=51 // pred_check
          %p336 = pneg %p43
        $region54: #{tpu_custom_call.1} parent=51 // pred_check_branch
          %338 = sbr.rel (%p336) target = $region56
        $region55: #{tpu_custom_call.1} parent=51 // pred_region
          %s339 = sand.u32 %s33, 1
          %s340 = scalar_lea.sflag [#allocation3], %s339
          %s341 = sand.u32 %s33, 1
          %s342 = smul.addr %s341, 32
          %s343 = scalar_lea.vmem [#allocation2], %s342
          %s345 = ssub.s32 512, 512
          %346 = vsyncadd %s340, %s345
          %s347 = smul.addr %s23, 4
          %s348 = smul.addr %s347, 128
          %s349 = scalar_lea.hbm %s0, %s348
          %s350 = sshll.u32 %s343, 4
          %s351 = int_to_ptr.vmem [resolvable:$true] %s350
          %356 = dma.hbm_to_vmem [thread:$0]  %s349, 512, %s351, %s340, 128, 128, 8
        $region56: #{tpu_custom_call.1} parent=51 // pred_fallthru
          _
        // Predicated region
        $region57: #{tpu_custom_call.1} parent=51 // pred_check
          %p357 = pneg %p69
        $region58: #{tpu_custom_call.1} parent=51 // pred_check_branch
          %359 = sbr.rel (%p357) target = $region60
        $region59: #{tpu_custom_call.1} parent=51 // pred_region
          %p360 = scmp.lt.s32.totalorder %s23, 1
          %s361 = scalar_select %p360, %s23, 1
          %s362 = scalar_lea.vmem %s1, %s361
        $region60: #{tpu_custom_call.1} parent=51 // pred_fallthru
          _
      $region52: #{tpu_custom_call.1} parent=5 // pred_fallthru
        _
      %p363 = scmp.le.s32.totalorder 1, %s23
      %p364 = scmp.lt.s32.totalorder %s23, 3
      %p365 = pnand %p363, %p364
      %p366 = pneg %p365
      // Predicated region
      $region61: #{tpu_custom_call.1} parent=5 // pred_check
        _
      $region62: #{tpu_custom_call.1} parent=5 // pred_check_branch
        %368 = sbr.rel (%p365) target = $region64
      $region63: #{tpu_custom_call.1} parent=5 // pred_region
        %s369 = ssub.s32 %s23, 1
        %s370 = sand.u32 %s36, 1
        %s371 = scalar_lea.sflag [#allocation3], %s370
        %s372 = sand.u32 %s36, 1
        %s373 = smul.addr %s372, 32
        %s374 = scalar_lea.vmem [#allocation2], %s373
        // Predicated region
        $region65: #{tpu_custom_call.1} parent=63 // pred_check
          %p375 = pneg %p49
        $region66: #{tpu_custom_call.1} parent=63 // pred_check_branch
          %377 = sbr.rel (%p375) target = $region68
        $region67: #{tpu_custom_call.1} parent=63 // pred_region
          %378 = dma.done %s371, 512
        $region68: #{tpu_custom_call.1} parent=63 // pred_fallthru
          _
        %s379 = sand.u32 %s36, 1
        %s380 = scalar_lea.sflag [#allocation3], %s379
        %s381 = sand.u32 %s36, 1
        %s382 = smul.addr %s381, 32
        %s383 = scalar_lea.vmem [#allocation2], %s382
        %p384 = pneg %p49
        %p385 = pneg %p46
        %p386 = scmp.lt.s32.totalorder %s28, 1
        %s387 = scalar_select %p386, %s28, 1
        %s388 = scalar_lea.vmem %s1, %s387
        %p389 = pneg %p75
        %p390 = pneg %p72
        %p391 = pneg %p96
        %p392 = pneg %p93
        %p393 = pneg %p117
        %p394 = pneg %p114
        %p395 = pneg %p138
        %p396 = pneg %p135
        %p397 = pneg %p159
        %p398 = pneg %p156
        %p399 = pneg %p180
        %p400 = pneg %p177
        %p401 = pneg %p201
        %p402 = pneg %p198
        %p403 = pneg %p222
        %p404 = pneg %p219
        %p405 = pneg %p243
        %p406 = pneg %p240
        %p407 = pneg %p264
        %p408 = pneg %p261
        %p409 = pneg %p290
        %p410 = pneg %p287
        %s411 = sand.u32 %s277, 1
        %s412 = scalar_lea.sflag [#allocation4], %s411
        %s413 = sand.u32 %s277, 1
        %s414 = smul.addr %s413, 8
        %s415 = scalar_lea.vmem [#allocation5], %s414
        %p416 = scmp.lt.s32.totalorder %s28, 1
        %s417 = scalar_select %p416, %s28, 1
        %s418 = scalar_lea.vmem %s1, %s417
        %v419 = vld [vmem:[%s374] sm:$0xff]
        %v420 = vld [vmem:[%s374 + $0x8] sm:$0xff]
        %v421 = vld [vmem:[%s374 + $0x10] sm:$0xff]
        %v422 = vld [vmem:[%s374 + $0x18] sm:$0xff]
        %vm423 = vcmask 517120
        %v424 = vsel %vm423, %v419, 0.0
        %v425 = vsel %vm423, %v420, 0.0
        %v426 = vadd.f32 %v424, %v425
        %v427 = vsel %vm423, %v421, 0.0
        %v428 = vadd.f32 %v426, %v427
        %v429 = vsel %vm423, %v422, 0.0
        %v430 = vadd.f32 %v428, %v429
        %431 = vadd.xlane.f32.xlu0 %v430
        %v432 = vpop.xlane.xlu0 %431
        %v433 = vrot.slane %v432, 4
        %v434 = vadd.f32 %v432, %v433
        %v435 = vrot.slane %v434, 2
        %v436 = vadd.f32 %v434, %v435
        %v437 = vrot.slane %v436, 1
        %v438 = vadd.f32 %v436, %v437
        %s439 = vtos %v438
        %s440 = smul.f32 %s439, 0.001953125
        %v441 = vstv %s440
        %v442 = vsub.f32 %v419, %v441
        %v443 = vsub.f32 %v420, %v441
        %v444 = vsub.f32 %v421, %v441
        %v445 = vsub.f32 %v422, %v441
        %v446 = vmul.f32 %v442, %v442
        %v447 = vmul.f32 %v443, %v443
        %v448 = vmul.f32 %v444, %v444
        %v449 = vmul.f32 %v445, %v445
        %v450 = vsel %vm423, %v446, 0.0
        %v451 = vsel %vm423, %v447, 0.0
        %v452 = vadd.f32 %v450, %v451
        %v453 = vsel %vm423, %v448, 0.0
        %v454 = vadd.f32 %v452, %v453
        %v455 = vsel %vm423, %v449, 0.0
        %v456 = vadd.f32 %v454, %v455
        %457 = vadd.xlane.f32.xlu0 %v456
        %v458 = vpop.xlane.xlu0 %457
        %v459 = vrot.slane %v458, 4
        %v460 = vadd.f32 %v458, %v459
        %v461 = vrot.slane %v460, 2
        %v462 = vadd.f32 %v460, %v461
        %v463 = vrot.slane %v462, 1
        %v464 = vadd.f32 %v462, %v463
        %s465 = vtos %v464
        %s466 = smul.f32 %s465, 0.001953125
        %s467 = sadd.f32 %s466, 1e-05
        %v468 = vstv %s467
        %v469 = vrsqrt.pop %v468
        %s470 = vtos %v469
        %v471 = vstv %s470
        %v472 = vmul.f32 %v442, %v471
        %v473 = vmul.f32 %v443, %v471
        %v474 = vmul.f32 %v444, %v471
        %v475 = vmul.f32 %v445, %v471
        %v480 = vrot.slane %v419, 2
        %v481 = vrot.slane %v420, 2
        %v482 = vrot.slane %v421, 2
        %v483 = vrot.slane %v422, 2
        %v488 = vsel %vm423, %v480, 0.0
        %v489 = vsel %vm423, %v481, 0.0
        %v490 = vadd.f32 %v488, %v489
        %v491 = vsel %vm423, %v482, 0.0
        %v492 = vadd.f32 %v490, %v491
        %v493 = vsel %vm423, %v483, 0.0
        %v494 = vadd.f32 %v492, %v493
        %495 = vadd.xlane.f32.xlu0 %v494
        %v496 = vpop.xlane.xlu0 %495
        %v497 = vrot.slane %v496, 4
        %v498 = vadd.f32 %v496, %v497
        %v499 = vrot.slane %v498, 2
        %v500 = vadd.f32 %v498, %v499
        %v501 = vrot.slane %v500, 1
        %v502 = vadd.f32 %v500, %v501
        %s503 = vtos %v502
        %s504 = smul.f32 %s503, 0.001953125
        %v505 = vstv %s504
        %v506 = vsub.f32 %v419, %v505
        %v507 = vsub.f32 %v420, %v505
        %v508 = vsub.f32 %v421, %v505
        %v509 = vsub.f32 %v422, %v505
        %v510 = vmul.f32 %v506, %v506
        %v511 = vmul.f32 %v507, %v507
        %v512 = vmul.f32 %v508, %v508
        %v513 = vmul.f32 %v509, %v509
        %v518 = vrot.slane %v510, 2
        %v519 = vrot.slane %v511, 2
        %v520 = vrot.slane %v512, 2
        %v521 = vrot.slane %v513, 2
        %v526 = vsel %vm423, %v518, 0.0
        %v527 = vsel %vm423, %v519, 0.0
        %v528 = vadd.f32 %v526, %v527
        %v529 = vsel %vm423, %v520, 0.0
        %v530 = vadd.f32 %v528, %v529
        %v531 = vsel %vm423, %v521, 0.0
        %v532 = vadd.f32 %v530, %v531
        %533 = vadd.xlane.f32.xlu0 %v532
        %v534 = vpop.xlane.xlu0 %533
        %v535 = vrot.slane %v534, 4
        %v536 = vadd.f32 %v534, %v535
        %v537 = vrot.slane %v536, 2
        %v538 = vadd.f32 %v536, %v537
        %v539 = vrot.slane %v538, 1
        %v540 = vadd.f32 %v538, %v539
        %s541 = vtos %v540
        %s542 = smul.f32 %s541, 0.001953125
        %s543 = sadd.f32 %s542, 1e-05
        %v544 = vstv %s543
        %v545 = vrsqrt.pop %v544
        %s546 = vtos %v545
        %v547 = vstv %s546
        %v548 = vmul.f32 %v506, %v547
        %v549 = vmul.f32 %v507, %v547
        %v550 = vmul.f32 %v508, %v547
        %v551 = vmul.f32 %v509, %v547
        %v552 = vrot.slane %v419, 4
        %v553 = vrot.slane %v420, 4
        %v554 = vrot.slane %v421, 4
        %v555 = vrot.slane %v422, 4
        %v560 = vsel %vm423, %v552, 0.0
        %v561 = vsel %vm423, %v553, 0.0
        %v562 = vadd.f32 %v560, %v561
        %v563 = vsel %vm423, %v554, 0.0
        %v564 = vadd.f32 %v562, %v563
        %v565 = vsel %vm423, %v555, 0.0
        %v566 = vadd.f32 %v564, %v565
        %567 = vadd.xlane.f32.xlu0 %v566
        %v568 = vpop.xlane.xlu0 %567
        %v569 = vrot.slane %v568, 4
        %v570 = vadd.f32 %v568, %v569
        %v571 = vrot.slane %v570, 2
        %v572 = vadd.f32 %v570, %v571
        %v573 = vrot.slane %v572, 1
        %v574 = vadd.f32 %v572, %v573
        %s575 = vtos %v574
        %s576 = smul.f32 %s575, 0.001953125
        %v577 = vstv %s576
        %v578 = vsub.f32 %v419, %v577
        %v579 = vsub.f32 %v420, %v577
        %v580 = vsub.f32 %v421, %v577
        %v581 = vsub.f32 %v422, %v577
        %v582 = vmul.f32 %v578, %v578
        %v583 = vmul.f32 %v579, %v579
        %v584 = vmul.f32 %v580, %v580
        %v585 = vmul.f32 %v581, %v581
        %v590 = vrot.slane %v582, 4
        %v591 = vrot.slane %v583, 4
        %v592 = vrot.slane %v584, 4
        %v593 = vrot.slane %v585, 4
        %v598 = vsel %vm423, %v590, 0.0
        %v599 = vsel %vm423, %v591, 0.0
        %v600 = vadd.f32 %v598, %v599
        %v601 = vsel %vm423, %v592, 0.0
        %v602 = vadd.f32 %v600, %v601
        %v603 = vsel %vm423, %v593, 0.0
        %v604 = vadd.f32 %v602, %v603
        %605 = vadd.xlane.f32.xlu0 %v604
        %v606 = vpop.xlane.xlu0 %605
        %v607 = vrot.slane %v606, 4
        %v608 = vadd.f32 %v606, %v607
        %v609 = vrot.slane %v608, 2
        %v610 = vadd.f32 %v608, %v609
        %v611 = vrot.slane %v610, 1
        %v612 = vadd.f32 %v610, %v611
        %s613 = vtos %v612
        %s614 = smul.f32 %s613, 0.001953125
        %s615 = sadd.f32 %s614, 1e-05
        %v616 = vstv %s615
        %v617 = vrsqrt.pop %v616
        %s618 = vtos %v617
        %v619 = vstv %s618
        %v620 = vmul.f32 %v578, %v619
        %v621 = vmul.f32 %v579, %v619
        %v622 = vmul.f32 %v580, %v619
        %v623 = vmul.f32 %v581, %v619
        %v624 = vrot.slane %v419, 6
        %v625 = vrot.slane %v420, 6
        %v626 = vrot.slane %v421, 6
        %v627 = vrot.slane %v422, 6
        %v632 = vsel %vm423, %v624, 0.0
        %v633 = vsel %vm423, %v625, 0.0
        %v634 = vadd.f32 %v632, %v633
        %v635 = vsel %vm423, %v626, 0.0
        %v636 = vadd.f32 %v634, %v635
        %v637 = vsel %vm423, %v627, 0.0
        %v638 = vadd.f32 %v636, %v637
        %639 = vadd.xlane.f32.xlu0 %v638
        %v640 = vpop.xlane.xlu0 %639
        %v641 = vrot.slane %v640, 4
        %v642 = vadd.f32 %v640, %v641
        %v643 = vrot.slane %v642, 2
        %v644 = vadd.f32 %v642, %v643
        %v645 = vrot.slane %v644, 1
        %v646 = vadd.f32 %v644, %v645
        %s647 = vtos %v646
        %s648 = smul.f32 %s647, 0.001953125
        %v649 = vstv %s648
        %v650 = vsub.f32 %v419, %v649
        %v651 = vsub.f32 %v420, %v649
        %v652 = vsub.f32 %v421, %v649
        %v653 = vsub.f32 %v422, %v649
        %v654 = vmul.f32 %v650, %v650
        %v655 = vmul.f32 %v651, %v651
        %v656 = vmul.f32 %v652, %v652
        %v657 = vmul.f32 %v653, %v653
        %v662 = vrot.slane %v654, 6
        %v663 = vrot.slane %v655, 6
        %v664 = vrot.slane %v656, 6
        %v665 = vrot.slane %v657, 6
        %v670 = vsel %vm423, %v662, 0.0
        %v671 = vsel %vm423, %v663, 0.0
        %v672 = vadd.f32 %v670, %v671
        %v673 = vsel %vm423, %v664, 0.0
        %v674 = vadd.f32 %v672, %v673
        %v675 = vsel %vm423, %v665, 0.0
        %v676 = vadd.f32 %v674, %v675
        %677 = vadd.xlane.f32.xlu0 %v676
        %v678 = vpop.xlane.xlu0 %677
        %v679 = vrot.slane %v678, 4
        %v680 = vadd.f32 %v678, %v679
        %v681 = vrot.slane %v680, 2
        %v682 = vadd.f32 %v680, %v681
        %v683 = vrot.slane %v682, 1
        %v684 = vadd.f32 %v682, %v683
        %s685 = vtos %v684
        %s686 = smul.f32 %s685, 0.001953125
        %s687 = sadd.f32 %s686, 1e-05
        %v688 = vstv %s687
        %v689 = vrsqrt.pop %v688
        %s690 = vtos %v689
        %v691 = vstv %s690
        %v692 = vmul.f32 %v650, %v691
        %v693 = vmul.f32 %v651, %v691
        %v694 = vmul.f32 %v652, %v691
        %v695 = vmul.f32 %v653, %v691
        %vm696 = vcmask 1041408
        %v697 = vsel %vm696, %v472, %v548
        %v698 = vsel %vm696, %v473, %v549
        %v699 = vsel %vm696, %v474, %v550
        %v700 = vsel %vm696, %v475, %v551
        %vm701 = vcmask 1043456
        %v702 = vsel %vm701, %v697, %v620
        %v703 = vsel %vm701, %v698, %v621
        %v704 = vsel %vm701, %v699, %v622
        %v705 = vsel %vm701, %v700, %v623
        %vm706 = vcmask 1045504
        %v707 = vsel %vm706, %v702, %v692
        %v708 = vsel %vm706, %v703, %v693
        %v709 = vsel %vm706, %v704, %v694
        %v710 = vsel %vm706, %v705, %v695
        %v711 = vld [vmem:[%s2] sm:$0xff]
        %713 = vset.pattern.permute.xlu0 0
        %714 = vperm.xlu0 %713, %v711
        %v715 = vpop.permute.xlu0 %714
        %v717 = vmul.f32 %v707, %v715
        %v718 = vmul.f32 %v708, %v715
        %v719 = vmul.f32 %v709, %v715
        %v720 = vmul.f32 %v710, %v715
        %v721 = vld [vmem:[%s3] sm:$0xff]
        %723 = vset.pattern.permute.xlu0 0
        %724 = vperm.xlu0 %723, %v721
        %v725 = vpop.permute.xlu0 %724
        %v727 = vadd.f32 %v717, %v725
        %v728 = vadd.f32 %v718, %v725
        %v729 = vadd.f32 %v719, %v725
        %v730 = vadd.f32 %v720, %v725
        %v731 = vmin.f32 %v727, 0.0
        %v732 = vmin.f32 %v728, 0.0
        %v733 = vmin.f32 %v729, 0.0
        %v734 = vmin.f32 %v730, 0.0
        %vm735 = vcmp.gt.f32.partialorder %v727, 0.0
        %vm736 = vcmp.gt.f32.partialorder %v728, 0.0
        %vm737 = vcmp.gt.f32.partialorder %v729, 0.0
        %vm738 = vcmp.gt.f32.partialorder %v730, 0.0
        %v739 = vmul.f32 %v731, 1.442695
        %v740 = vpow.pop %v739
        %v741 = vmul.f32 %v732, 1.442695
        %v742 = vpow.pop %v741
        %v743 = vmul.f32 %v733, 1.442695
        %v744 = vpow.pop %v743
        %v745 = vmul.f32 %v734, 1.442695
        %v746 = vpow.pop %v745
        %v747 = vsub.f32 %v740, 1.0
        %v748 = vsub.f32 %v742, 1.0
        %v749 = vsub.f32 %v744, 1.0
        %v750 = vsub.f32 %v746, 1.0
        %v751 = vmul.f32 %v747, 1.6732632
        %v752 = vmul.f32 %v748, 1.6732632
        %v753 = vmul.f32 %v749, 1.6732632
        %v754 = vmul.f32 %v750, 1.6732632
        %v755 = vsel %vm735, %v727, %v751
        %v756 = vsel %vm736, %v728, %v752
        %v757 = vsel %vm737, %v729, %v753
        %v758 = vsel %vm738, %v730, %v754
        %v759 = vmul.f32 %v755, 1.050701
        %v760 = vmul.f32 %v756, 1.050701
        %v761 = vmul.f32 %v757, 1.050701
        %v762 = vmul.f32 %v758, 1.050701
        %vm763 = vcmask 523264
        %v764 = vsel %vm763, %v759, 0.0
        %v765 = vsel %vm763, %v760, 0.0
        %v766 = vadd.f32 %v764, %v765
        %v767 = vsel %vm763, %v761, 0.0
        %v768 = vadd.f32 %v766, %v767
        %v769 = vsel %vm763, %v762, 0.0
        %v770 = vadd.f32 %v768, %v769
        %v771 = vmul.f32 %v770, 0.25
        %v772 = vld [vmem:[%s418] sm:$0x1]
        %v773 = vmin.f32 %v772, 0.0
        %vm774 = vcmp.gt.f32.partialorder %v772, 0.0
        %v775 = vmul.f32 %v773, 1.442695
        %v776 = vpow.pop %v775
        %v777 = vsub.f32 %v776, 1.0
        %v778 = vmul.f32 %v777, 1.6732632
        %v779 = vsel %vm774, %v772, %v778
        %v780 = vmul.f32 %v779, 1.050701
        %v781 = vld [vmem:[%s4] sm:$0xff]
        %v783 = vlaneseq
        %v784 = vshrl.u32 %v783, 7
        %v785 = vsub.s32 0, %v784
        %v786 = vrot.slane %v780, %v785
        %v788 = vmul.f32 %v781, %v786
        %vm789 = vcmask 261120
        %v790 = vsel %vm789, %v788, 0.0
        %791 = vadd.xlane.f32.xlu0 %v790
        %v792 = vpop.xlane.xlu0 %791
        %v793 = vld [vmem:[%s5] sm:$0xff]
        %v794 = vadd.f32 %v792, %v793
        %796 = vset.pattern.permute.xlu0 0
        %797 = vperm.xlu0 %796, %v794
        %v798 = vpop.permute.xlu0 %797
        %v800 = vadd.f32 %v771, %v798
        %v801 = vsel %vm423, %v800, 0.0
        %802 = vadd.xlane.f32.xlu0 %v801
        %v803 = vpop.xlane.xlu0 %802
        %v804 = vrot.slane %v803, 4
        %v805 = vadd.f32 %v803, %v804
        %v806 = vrot.slane %v805, 2
        %v807 = vadd.f32 %v805, %v806
        %v808 = vrot.slane %v807, 1
        %v809 = vadd.f32 %v807, %v808
        %s810 = vtos %v809
        %s811 = smul.f32 %s810, 0.0078125
        %v812 = vstv %s811
        %v813 = vsub.f32 %v800, %v812
        %v814 = vmul.f32 %v813, %v813
        %v815 = vsel %vm423, %v814, 0.0
        %816 = vadd.xlane.f32.xlu0 %v815
        %v817 = vpop.xlane.xlu0 %816
        %v818 = vrot.slane %v817, 4
        %v819 = vadd.f32 %v817, %v818
        %v820 = vrot.slane %v819, 2
        %v821 = vadd.f32 %v819, %v820
        %v822 = vrot.slane %v821, 1
        %v823 = vadd.f32 %v821, %v822
        %s824 = vtos %v823
        %s825 = smul.f32 %s824, 0.0078125
        %s826 = sadd.f32 %s825, 1e-05
        %v827 = vstv %s826
        %v828 = vrsqrt.pop %v827
        %s829 = vtos %v828
        %v830 = vstv %s829
        %v831 = vmul.f32 %v813, %v830
        %v833 = vrot.slane %v800, 2
        %v835 = vsel %vm423, %v833, 0.0
        %836 = vadd.xlane.f32.xlu0 %v835
        %v837 = vpop.xlane.xlu0 %836
        %v838 = vrot.slane %v837, 4
        %v839 = vadd.f32 %v837, %v838
        %v840 = vrot.slane %v839, 2
        %v841 = vadd.f32 %v839, %v840
        %v842 = vrot.slane %v841, 1
        %v843 = vadd.f32 %v841, %v842
        %s844 = vtos %v843
        %s845 = smul.f32 %s844, 0.0078125
        %v846 = vstv %s845
        %v847 = vsub.f32 %v800, %v846
        %v848 = vmul.f32 %v847, %v847
        %v850 = vrot.slane %v848, 2
        %v852 = vsel %vm423, %v850, 0.0
        %853 = vadd.xlane.f32.xlu0 %v852
        %v854 = vpop.xlane.xlu0 %853
        %v855 = vrot.slane %v854, 4
        %v856 = vadd.f32 %v854, %v855
        %v857 = vrot.slane %v856, 2
        %v858 = vadd.f32 %v856, %v857
        %v859 = vrot.slane %v858, 1
        %v860 = vadd.f32 %v858, %v859
        %s861 = vtos %v860
        %s862 = smul.f32 %s861, 0.0078125
        %s863 = sadd.f32 %s862, 1e-05
        %v864 = vstv %s863
        %v865 = vrsqrt.pop %v864
        %s866 = vtos %v865
        %v867 = vstv %s866
        %v868 = vmul.f32 %v847, %v867
        %v869 = vrot.slane %v800, 4
        %v871 = vsel %vm423, %v869, 0.0
        %872 = vadd.xlane.f32.xlu0 %v871
        %v873 = vpop.xlane.xlu0 %872
        %v874 = vrot.slane %v873, 4
        %v875 = vadd.f32 %v873, %v874
        %v876 = vrot.slane %v875, 2
        %v877 = vadd.f32 %v875, %v876
        %v878 = vrot.slane %v877, 1
        %v879 = vadd.f32 %v877, %v878
        %s880 = vtos %v879
        %s881 = smul.f32 %s880, 0.0078125
        %v882 = vstv %s881
        %v883 = vsub.f32 %v800, %v882
        %v884 = vmul.f32 %v883, %v883
        %v886 = vrot.slane %v884, 4
        %v888 = vsel %vm423, %v886, 0.0
        %889 = vadd.xlane.f32.xlu0 %v888
        %v890 = vpop.xlane.xlu0 %889
        %v891 = vrot.slane %v890, 4
        %v892 = vadd.f32 %v890, %v891
        %v893 = vrot.slane %v892, 2
        %v894 = vadd.f32 %v892, %v893
        %v895 = vrot.slane %v894, 1
        %v896 = vadd.f32 %v894, %v895
        %s897 = vtos %v896
        %s898 = smul.f32 %s897, 0.0078125
        %s899 = sadd.f32 %s898, 1e-05
        %v900 = vstv %s899
        %v901 = vrsqrt.pop %v900
        %s902 = vtos %v901
        %v903 = vstv %s902
        %v904 = vmul.f32 %v883, %v903
        %v905 = vrot.slane %v800, 6
        %v907 = vsel %vm423, %v905, 0.0
        %908 = vadd.xlane.f32.xlu0 %v907
        %v909 = vpop.xlane.xlu0 %908
        %v910 = vrot.slane %v909, 4
        %v911 = vadd.f32 %v909, %v910
        %v912 = vrot.slane %v911, 2
        %v913 = vadd.f32 %v911, %v912
        %v914 = vrot.slane %v913, 1
        %v915 = vadd.f32 %v913, %v914
        %s916 = vtos %v915
        %s917 = smul.f32 %s916, 0.0078125
        %v918 = vstv %s917
        %v919 = vsub.f32 %v800, %v918
        %v920 = vmul.f32 %v919, %v919
        %v922 = vrot.slane %v920, 6
        %v924 = vsel %vm423, %v922, 0.0
        %925 = vadd.xlane.f32.xlu0 %v924
        %v926 = vpop.xlane.xlu0 %925
        %v927 = vrot.slane %v926, 4
        %v928 = vadd.f32 %v926, %v927
        %v929 = vrot.slane %v928, 2
        %v930 = vadd.f32 %v928, %v929
        %v931 = vrot.slane %v930, 1
        %v932 = vadd.f32 %v930, %v931
        %s933 = vtos %v932
        %s934 = smul.f32 %s933, 0.0078125
        %s935 = sadd.f32 %s934, 1e-05
        %v936 = vstv %s935
        %v937 = vrsqrt.pop %v936
        %s938 = vtos %v937
        %v939 = vstv %s938
        %v940 = vmul.f32 %v919, %v939
        %v941 = vsel %vm696, %v831, %v868
        %v942 = vsel %vm701, %v941, %v904
        %v943 = vsel %vm706, %v942, %v940
        %v944 = vld [vmem:[%s6] sm:$0xff]
        %946 = vset.pattern.permute.xlu0 0
        %947 = vperm.xlu0 %946, %v944
        %v948 = vpop.permute.xlu0 %947
        %v950 = vmul.f32 %v943, %v948
        %v951 = vld [vmem:[%s7] sm:$0xff]
        %953 = vset.pattern.permute.xlu0 0
        %954 = vperm.xlu0 %953, %v951
        %v955 = vpop.permute.xlu0 %954
        %v957 = vadd.f32 %v950, %v955
        %v958 = vmin.f32 %v957, 0.0
        %vm959 = vcmp.gt.f32.partialorder %v957, 0.0
        %v960 = vmul.f32 %v958, 1.442695
        %v961 = vpow.pop %v960
        %v962 = vsub.f32 %v961, 1.0
        %v963 = vmul.f32 %v962, 1.6732632
        %v964 = vsel %vm959, %v957, %v963
        %v965 = vmul.f32 %v964, 1.050701
        %967 = vrot.lane.b32.xlu0 %v965, 9
        %v968 = vpop.permute.xlu0 %967
        %vm970 = vcmask 72704
        %v971 = vsel %vm970, 0.0, %v968
        %v972 = vld [vmem:[%s10] sm:$0x1]
        %v974 = vlaneseq
        %v975 = vshrl.u32 %v974, 7
        %v976 = vsub.s32 0, %v975
        %v977 = vrot.slane %v972, %v976
        %v979 = vmul.f32 %v971, %v977
        %980 = vrot.lane.b32.xlu0 %v965, 8
        %v981 = vpop.permute.xlu0 %980
        %vm983 = vcmask 64512
        %v984 = vsel %vm983, 0.0, %v981
        %s985 = scalar_lea.vmem %s10, 1
        %v986 = vld [vmem:[%s985] sm:$0x1]
        %v988 = vlaneseq
        %v989 = vshrl.u32 %v988, 7
        %v990 = vsub.s32 0, %v989
        %v991 = vrot.slane %v986, %v990
        %v993 = vmul.f32 %v984, %v991
        %994 = vrot.lane.b32.xlu0 %v965, 7
        %v995 = vpop.permute.xlu0 %994
        %vm997 = vcmask 56320
        %v998 = vsel %vm997, 0.0, %v995
        %s999 = scalar_lea.vmem %s10, 2
        %v1000 = vld [vmem:[%s999] sm:$0x1]
        %v1002 = vlaneseq
        %v1003 = vshrl.u32 %v1002, 7
        %v1004 = vsub.s32 0, %v1003
        %v1005 = vrot.slane %v1000, %v1004
        %v1007 = vmul.f32 %v998, %v1005
        %1008 = vrot.lane.b32.xlu0 %v965, 1
        %v1009 = vpop.permute.xlu0 %1008
        %vm1011 = vcmask 7168
        %v1012 = vsel %vm1011, 0.0, %v1009
        %s1013 = scalar_lea.vmem %s10, 3
        %v1014 = vld [vmem:[%s1013] sm:$0x1]
        %v1016 = vlaneseq
        %v1017 = vshrl.u32 %v1016, 7
        %v1018 = vsub.s32 0, %v1017
        %v1019 = vrot.slane %v1014, %v1018
        %v1021 = vmul.f32 %v1012, %v1019
        %s1022 = scalar_lea.vmem %s10, 4
        %v1023 = vld [vmem:[%s1022] sm:$0x1]
        %v1025 = vlaneseq
        %v1026 = vshrl.u32 %v1025, 7
        %v1027 = vsub.s32 0, %v1026
        %v1028 = vrot.slane %v1023, %v1027
        %v1030 = vmul.f32 %v965, %v1028
        %1031 = vrot.lane.b32.xlu0 %v965, 127
        %v1032 = vpop.permute.xlu0 %1031
        %vm1034 = vcmask 515072
        %v1035 = vsel %vm1034, %v1032, 0.0
        %s1036 = scalar_lea.vmem %s10, 5
        %v1037 = vld [vmem:[%s1036] sm:$0x1]
        %v1039 = vlaneseq
        %v1040 = vshrl.u32 %v1039, 7
        %v1041 = vsub.s32 0, %v1040
        %v1042 = vrot.slane %v1037, %v1041
        %v1044 = vmul.f32 %v1035, %v1042
        %1045 = vrot.lane.b32.xlu0 %v965, 121
        %v1046 = vpop.permute.xlu0 %1045
        %vm1048 = vcmask 465920
        %v1049 = vsel %vm1048, %v1046, 0.0
        %s1050 = scalar_lea.vmem %s10, 6
        %v1051 = vld [vmem:[%s1050] sm:$0x1]
        %v1053 = vlaneseq
        %v1054 = vshrl.u32 %v1053, 7
        %v1055 = vsub.s32 0, %v1054
        %v1056 = vrot.slane %v1051, %v1055
        %v1058 = vmul.f32 %v1049, %v1056
        %1059 = vrot.lane.b32.xlu0 %v965, 120
        %v1060 = vpop.permute.xlu0 %1059
        %vm1062 = vcmask 457728
        %v1063 = vsel %vm1062, %v1060, 0.0
        %s1064 = scalar_lea.vmem %s10, 7
        %v1065 = vld [vmem:[%s1064] sm:$0x1]
        %v1067 = vlaneseq
        %v1068 = vshrl.u32 %v1067, 7
        %v1069 = vsub.s32 0, %v1068
        %v1070 = vrot.slane %v1065, %v1069
        %v1072 = vmul.f32 %v1063, %v1070
        %1073 = vrot.lane.b32.xlu0 %v965, 119
        %v1074 = vpop.permute.xlu0 %1073
        %vm1076 = vcmask 449536
        %v1077 = vsel %vm1076, %v1074, 0.0
        %s1078 = scalar_lea.vmem %s10, 8
        %v1079 = vld [vmem:[%s1078] sm:$0x1]
        %v1081 = vlaneseq
        %v1082 = vshrl.u32 %v1081, 7
        %v1083 = vsub.s32 0, %v1082
        %v1084 = vrot.slane %v1079, %v1083
        %v1086 = vmul.f32 %v1077, %v1084
        %v1087 = vld [vmem:[%s8] sm:$0xff]
        %v1088 = vld [vmem:[%s9] sm:$0xff]
        %1090 = vset.pattern.permute.xlu0 0
        %1091 = vperm.xlu0 %1090, %v1088
        %v1092 = vpop.permute.xlu0 %1091
        %vm1094 = vcmask 588800
        %v1096 = vsel %vm1094, %v1087, 0
        %1098 = vmatprep.subr.mxu0 0.0
        %1099 = vmatpush1.msra.mxu0 %v979
        %1100 = vmatprep.subr.mxu0 0.0
        %1101 = vmatpush1.msra.mxu0 %v993
        %1102 = vmatprep.subr.mxu0 0.0
        %1103 = vmatpush1.msra.mxu0 %v1007
        %1104 = vmatprep.subr.mxu0 0.0
        %1105 = vmatpush1.msra.mxu0 %v1021
        %1106 = vmatprep.subr.mxu0 0.0
        %1107 = vmatpush1.msra.mxu0 %v1030
        %1108 = vmatprep.subr.mxu0 0.0
        %1109 = vmatpush1.msra.mxu0 %v1044
        %1110 = vmatprep.subr.mxu0 0.0
        %1111 = vmatpush1.msra.mxu0 %v1058
        %1112 = vmatprep.subr.mxu0 0.0
        %1113 = vmatpush1.msra.mxu0 %v1072
        %1114 = vmatprep.subr.mxu0 0.0
        %1115 = vmatpush1.msra.mxu0 %v1086
        %1116 = vmatprep.subr.mxu0 0.0
        %1117 = vmatpush1.msra.mxu0 0.0
        %1118 = vmatprep.subr.mxu0 0.0
        %1119 = vmatpush1.msra.mxu0 0.0
        %1120 = vmatprep.subr.mxu0 0.0
        %1121 = vmatpush1.msra.mxu0 0.0
        %1122 = vmatprep.subr.mxu0 0.0
        %1123 = vmatpush1.msra.mxu0 0.0
        %1124 = vmatprep.subr.mxu0 0.0
        %1125 = vmatpush1.msra.mxu0 0.0
        %1126 = vmatprep.subr.mxu0 0.0
        %1127 = vmatpush1.msra.mxu0 0.0
        %1128 = vmatprep.subr.mxu0 0.0
        %1129 = vmatpush1.msra.mxu0 0.0
        %1130 = vmatprep.subr.mxu0 0.0
        %1131 = vmatpush1.msra.mxu0 0.0
        %1132 = vmatprep.subr.mxu0 0.0
        %1133 = vmatpush1.msra.mxu0 0.0
        %1134 = vmatprep.subr.mxu0 0.0
        %1135 = vmatpush1.msra.mxu0 0.0
        %1136 = vmatprep.subr.mxu0 0.0
        %1137 = vmatpush1.msra.mxu0 0.0
        %1138 = vmatprep.subr.mxu0 0.0
        %1139 = vmatpush1.msra.mxu0 0.0
        %1140 = vmatprep.subr.mxu0 0.0
        %1141 = vmatpush1.msra.mxu0 0.0
        %1142 = vmatprep.subr.mxu0 0.0
        %1143 = vmatpush1.msra.mxu0 0.0
        %1144 = vmatprep.subr.mxu0 0.0
        %1145 = vmatpush1.msra.mxu0 0.0
        %1146 = vmatprep.subr.mxu0 0.0
        %1147 = vmatpush1.msra.mxu0 0.0
        %1148 = vmatprep.subr.mxu0 0.0
        %1149 = vmatpush1.msra.mxu0 0.0
        %1150 = vmatprep.subr.mxu0 0.0
        %1151 = vmatpush1.msra.mxu0 0.0
        %1152 = vmatprep.subr.mxu0 0.0
        %1153 = vmatpush1.msra.mxu0 0.0
        %1154 = vmatprep.subr.mxu0 0.0
        %1155 = vmatpush1.msra.mxu0 0.0
        %1156 = vmatprep.subr.mxu0 0.0
        %1157 = vmatpush1.msra.mxu0 0.0
        %1158 = vmatprep.subr.mxu0 0.0
        %1159 = vmatpush1.msra.mxu0 0.0
        %1160 = vmatprep.subr.mxu0 0.0
        %1161 = vmatpush1.msra.mxu0 0.0
        %1162 = vmatprep.mubr.f32.mxu0 0.0
        %1163 = vmatmul.mubr.f32.gmra.mrb[0].mxu0 %v1096
        %v1164 = vpop.f32.mrb[0].mxu0
        %v1165 = vadd.f32 %v1092, %v1164
        %v1166 = vpop.f32.mrb[0].mxu0
        %1167 = vdwg.mxu0
        %v1168 = vadd.f32 %v1165, %v800
        %1169 = vst.msk [vmem:[%s415] sm:$0xff] %vm763, %v1168
        %s1170 = sand.u32 %s277, 1
        %s1171 = scalar_lea.sflag [#allocation4], %s1170
        %s1172 = sand.u32 %s277, 1
        %s1173 = smul.addr %s1172, 8
        %s1174 = scalar_lea.vmem [#allocation5], %s1173
        // Predicated region
        $region69: #{tpu_custom_call.1} parent=63 // pred_check
          %p1175 = pneg %p287
        $region70: #{tpu_custom_call.1} parent=63 // pred_check_branch
          %1177 = sbr.rel (%p1175) target = $region72
        $region71: #{tpu_custom_call.1} parent=63 // pred_region
          %s1179 = ssub.s32 128, 128
          %1180 = vsyncadd %s1171, %s1179
          %s1181 = smul.addr %s28, 128
          %s1182 = scalar_lea.hbm %s11, %s1181
          %s1184 = sshll.u32 %s1174, 4
          %s1185 = int_to_ptr.vmem [resolvable:$true] %s1184
          %1187 = dma.vmem_to_hbm [thread:$0]  %s1185, 128, %s1182, %s1171
        $region72: #{tpu_custom_call.1} parent=63 // pred_fallthru
          _
      $region64: #{tpu_custom_call.1} parent=5 // pred_fallthru
        _
      %p1188 = scmp.le.s32.totalorder 2, %s23
      // Predicated region
      $region73: #{tpu_custom_call.1} parent=5 // pred_check
        %p1189 = pneg %p1188
      $region74: #{tpu_custom_call.1} parent=5 // pred_check_branch
        %1191 = sbr.rel (%p1189) target = $region76
      $region75: #{tpu_custom_call.1} parent=5 // pred_region
        %s1192 = ssub.s32 %s23, 2
        // Predicated region
        $region77: #{tpu_custom_call.1} parent=75 // pred_check
          %p1193 = pneg %p293
        $region78: #{tpu_custom_call.1} parent=75 // pred_check_branch
          %1195 = sbr.rel (%p1193) target = $region80
        $region79: #{tpu_custom_call.1} parent=75 // pred_region
          %s1196 = sand.u32 %s278, 1
          %s1197 = scalar_lea.sflag [#allocation4], %s1196
          %s1198 = sand.u32 %s278, 1
          %s1199 = smul.addr %s1198, 8
          %s1200 = scalar_lea.vmem [#allocation5], %s1199
          %1201 = dma.done %s1197, 128
        $region80: #{tpu_custom_call.1} parent=75 // pred_fallthru
          _
      $region76: #{tpu_custom_call.1} parent=5 // pred_fallthru
        _
    $region6: #{tpu_custom_call.1} parent=1 // loop_footer
      %s27 = sadd.s32 1, %s23
    $region7: #{tpu_custom_call.1} parent=1 // loop_footer_branch
      %22 = sbr.rel target = $region3
    $region8: #{tpu_custom_call.1} parent=1 // loop_exit
      _
    %1202 = vsyncpa [#allocation3], 1
    %s1203 = scalar_lea.sflag [#allocation3], 1
    %1204 = vsyncpa %s1203, 1
    %1205 = vsyncpa [#allocation4], 1
    %s1206 = scalar_lea.sflag [#allocation4], 1
    %1207 = vsyncpa %s1206, 1

</llo_original>
